<compile_context>
chip_gen: v5e
topology: v5e:2x2
jax: 0.10.0
libtpu: 0.0.40
codegen_flags: <defaults>
</compile_context>

<pallas_src>
import math
import jax
import jax.numpy as jnp
from jax.experimental import pallas as pl
from jax.experimental.pallas import tpu as pltpu

MAX_WORD_LENGTH = 30
INPUT_DIM = MAX_WORD_LENGTH * 28 + 26 + 1   # 867
INPUT_PAD = 896                             # 7 * 128 : aligned K for x @ W1
HIDDEN_DIM = 128
NUM_HEADS = 4
HEAD_DIM = HIDDEN_DIM // NUM_HEADS          # 32
OUT_DIM = 26
OUT_PAD = 128                               # lane-dense output width
NEG_INF = -1e30


def can_kernel(x_ref,
               w1_ref, b1_ref,
               wqkv_ref, bqkv_ref,
               wout_ref, bout_ref,
               out_ref):
    f32 = jnp.float32
    B = x_ref.shape[0]

    # ---- encoder layer 1 + ReLU (weights bf16-stored, math f32) ----
    h1 = jnp.dot(x_ref[...], w1_ref[...].astype(f32),
                 preferred_element_type=f32) + b1_ref[...]             # (B, 128)
    h1 = jnp.maximum(h1, 0.0)

    # ---- fused (encoder layer 2 + QKV in_proj), computed transposed so heads
    #      split along the sublane/leading axis (no lane slicing, no concat).
    #      Q rows are pre-scaled by 1/sqrt(HEAD_DIM).
    qkv_t = jnp.dot(wqkv_ref[...].astype(f32), h1.T,
                    preferred_element_type=f32) + bqkv_ref[...]        # (384, B)

    q3 = qkv_t[0:HIDDEN_DIM].reshape(NUM_HEADS, HEAD_DIM, B)           # (H, D, B)
    k3 = qkv_t[HIDDEN_DIM:2 * HIDDEN_DIM].reshape(NUM_HEADS, HEAD_DIM, B)
    v3 = qkv_t[2 * HIDDEN_DIM:3 * HIDDEN_DIM].reshape(NUM_HEADS, HEAD_DIM, B)
    qb = jnp.swapaxes(q3, 1, 2)                                        # (H, B, D)

    # ---- batched multi-head attention over the batch axis (seq_len == B) ----
    s = jnp.einsum('hqd,hdk->hqk', qb, k3,
                   preferred_element_type=f32)                         # (H, B, B)
    s = s - jnp.max(s, axis=-1, keepdims=True)
    p = jnp.exp(s)
    p = p * pl.reciprocal(jnp.sum(p, axis=-1, keepdims=True), approx=True)

    o_t = jnp.einsum('hdk,hqk->hdq', v3, p,
                     preferred_element_type=f32)                       # (H, D, B)
    attn = o_t.reshape(HIDDEN_DIM, B).T                                # (B, 128)

    # ---- fused (out_proj + output head), lane-dense, then softmax ----
    logits = jnp.dot(attn, wout_ref[...].astype(f32),
                     preferred_element_type=f32) + bout_ref[...]       # (B, 128)
    logits = logits - jnp.max(logits, axis=-1, keepdims=True)
    e = jnp.exp(logits)
    out_ref[...] = (e * pl.reciprocal(jnp.sum(e, axis=-1, keepdims=True),
                                      approx=True)).astype(out_ref.dtype)


def _vmem():
    # Whole array resident in VMEM; with no grid there is no double-buffering.
    return pl.BlockSpec(memory_space=pltpu.MemorySpace.VMEM)


def can_forward(x, kp):
    """x: (B, INPUT_DIM) float32; kp: dict from prep_kernel_params."""
    B = x.shape[0]
    x_pad = jnp.pad(x.astype(jnp.float32), ((0, 0), (0, INPUT_PAD - INPUT_DIM)))
    args = (x_pad,
            kp["w1"], kp["b1"],
            kp["wqkv"], kp["bqkv"],
            kp["wout"], kp["bout"])
    out = pl.pallas_call(
        can_kernel,
        out_shape=jax.ShapeDtypeStruct((B, OUT_PAD), jnp.float32),
        in_specs=[_vmem() for _ in args],
        out_specs=_vmem(),
    )(*args)
    return out[:, :OUT_DIM]


def init_params(key):
    """Canonical math-form parameters (shapes match the PyTorch module)."""
    ks = jax.random.split(key, 12)
    scl = 0.05

    def w(k, shape):
        return (scl * jax.random.normal(k, shape)).astype(jnp.float32)

    return {
        "W1": w(ks[0], (INPUT_DIM, HIDDEN_DIM)), "b1": w(ks[1], (HIDDEN_DIM,)),
        "W2": w(ks[2], (HIDDEN_DIM, HIDDEN_DIM)), "b2": w(ks[3], (HIDDEN_DIM,)),
        "Wq": w(ks[4], (HIDDEN_DIM, HIDDEN_DIM)), "bq": w(ks[5], (HIDDEN_DIM,)),
        "Wk": w(ks[6], (HIDDEN_DIM, HIDDEN_DIM)), "bk": w(ks[7], (HIDDEN_DIM,)),
        "Wv": w(ks[8], (HIDDEN_DIM, HIDDEN_DIM)), "bv": w(ks[9], (HIDDEN_DIM,)),
        "Wo": w(ks[10], (HIDDEN_DIM, HIDDEN_DIM)),
        "bo": jnp.zeros((HIDDEN_DIM,), jnp.float32),
        "Wout": w(ks[11], (HIDDEN_DIM, OUT_DIM)),
        "bout": jnp.zeros((OUT_DIM,), jnp.float32),
    }


def prep_kernel_params(cp):
    """One-time layout/precision transform:
       - pad W1 rows (867 -> 896),
       - fuse encoder layer 2 into the QKV in_proj (scale folded into Q),
       - fuse out_proj into the (lane-padded) output head,
       - store matrices as bf16, biases f32."""
    f32, bf16 = jnp.float32, jnp.bfloat16
    inv = 1.0 / math.sqrt(HEAD_DIM)

    w1 = jnp.pad(cp["W1"], ((0, INPUT_PAD - INPUT_DIM), (0, 0)))          # (896,128)

    # in_proj rows (PyTorch in_proj_weight layout), Q rows pre-scaled.
    wqkv_rows = jnp.concatenate([cp["Wq"].T * inv, cp["Wk"].T, cp["Wv"].T], 0)  # (384,128)
    bqkv = jnp.concatenate([cp["bq"] * inv, cp["bk"], cp["bv"]])                # (384,)
    # fold encoder layer 2 (no nonlinearity between encoder L2 and in_proj)
    w_enc_qkv = wqkv_rows @ cp["W2"].T                                          # (384,128)
    b_enc_qkv = wqkv_rows @ cp["b2"] + bqkv                                     # (384,)

    # fold out_proj into the output head (no nonlinearity between them)
    wout_pad = jnp.pad(cp["Wout"], ((0, 0), (0, OUT_PAD - OUT_DIM)))            # (128,128)
    w_out_fused = cp["Wo"] @ wout_pad                                           # (128,128)
    b_out_fused = cp["bo"] @ wout_pad + jnp.concatenate(
        [cp["bout"], jnp.full((OUT_PAD - OUT_DIM,), NEG_INF, f32)])             # (128,)

    return {
        "w1": w1.astype(bf16), "b1": cp["b1"][None, :].astype(f32),
        "wqkv": w_enc_qkv.astype(bf16), "bqkv": b_enc_qkv[:, None].astype(f32),
        "wout": w_out_fused.astype(bf16), "bout": b_out_fused[None, :].astype(f32),
    }


def reference_forward(x, kp):
    """Pure-JAX reference with the PyTorch per-head structure, using the same
    (bf16-rounded, fused, scale-folded) weights the kernel consumes."""
    f32 = jnp.float32
    x_pad = jnp.pad(x.astype(f32), ((0, 0), (0, INPUT_PAD - INPUT_DIM)))
    h1 = jnp.maximum(x_pad @ kp["w1"].astype(f32) + kp["b1"], 0.0)
    qkv = h1 @ kp["wqkv"].astype(f32).T + kp["bqkv"].astype(f32)[:, 0]   # (B, 384)
    q = qkv[:, 0:HIDDEN_DIM]                      # scale already folded
    k = qkv[:, HIDDEN_DIM:2 * HIDDEN_DIM]
    v = qkv[:, 2 * HIDDEN_DIM:]
    outs = []
    for hd in range(NUM_HEADS):
        sl = slice(hd * HEAD_DIM, (hd + 1) * HEAD_DIM)
        s = q[:, sl] @ k[:, sl].T
        pa = jax.nn.softmax(s, axis=-1)
        outs.append(pa @ v[:, sl])
    attn = jnp.concatenate(outs, axis=-1)                                # (B, 128)
    logits = attn @ kp["wout"].astype(f32) + kp["bout"]
    return jax.nn.softmax(logits, axis=-1)[:, :OUT_DIM]


if __name__ == "__main__":
    key = jax.random.PRNGKey(0)
    k_x, k_p = jax.random.split(key)

    B = 8
    x = jax.random.normal(k_x, (B, INPUT_DIM), dtype=jnp.float32)
    kp = prep_kernel_params(init_params(k_p))

    out = jax.block_until_ready(can_forward(x, kp))
    ref = reference_forward(x, kp)

    assert out.shape == (B, OUT_DIM)
    assert bool(jnp.allclose(out, ref, atol=2e-3, rtol=2e-2)), "mismatch vs reference"

    print("KERNEL_OK")
</pallas_src>

<mosaic_0001>
module attributes {stable_mosaic.version = 11 : i64} {
  func.func @can_kernel(%arg0: memref<8x896xf32, #tpu.memory_space<vmem>>, %arg1: memref<896x128xbf16, #tpu.memory_space<vmem>>, %arg2: memref<1x128xf32, #tpu.memory_space<vmem>>, %arg3: memref<384x128xbf16, #tpu.memory_space<vmem>>, %arg4: memref<384x1xf32, #tpu.memory_space<vmem>>, %arg5: memref<128x128xbf16, #tpu.memory_space<vmem>>, %arg6: memref<1x128xf32, #tpu.memory_space<vmem>>, %arg7: memref<8x128xf32, #tpu.memory_space<vmem>>) attributes {dimension_semantics = [], scalar_prefetch = 0 : i64, scratch_operands = 0 : i64, tpu.core_type = #tpu.core_type<tc>} {
    %c0 = arith.constant 0 : index
    %c0_0 = arith.constant 0 : index
    %0 = vector.load %arg0[%c0, %c0_0] : memref<8x896xf32, #tpu.memory_space<vmem>>, vector<8x896xf32>
    %c0_1 = arith.constant 0 : index
    %c0_2 = arith.constant 0 : index
    %1 = vector.load %arg1[%c0_1, %c0_2] : memref<896x128xbf16, #tpu.memory_space<vmem>>, vector<896x128xbf16>
    %2 = arith.extf %1 : vector<896x128xbf16> to vector<896x128xf32>
    %cst = arith.constant dense<0.000000e+00> : vector<8x128xf32>
    %3 = tpu.matmul %0, %2, %cst {dimension_numbers = #tpu.dot_dimension_numbers<[1], [0], [0], [1], [0, 0, 1, 1], [], []>} : vector<8x896xf32>, vector<896x128xf32>, vector<8x128xf32> -> vector<8x128xf32>
    %c0_3 = arith.constant 0 : index
    %c0_4 = arith.constant 0 : index
    %4 = vector.load %arg2[%c0_3, %c0_4] : memref<1x128xf32, #tpu.memory_space<vmem>>, vector<1x128xf32>
    %5 = vector.broadcast %4 : vector<1x128xf32> to vector<8x128xf32>
    %6 = arith.addf %3, %5 : vector<8x128xf32>
    %cst_5 = arith.constant 0.000000e+00 : f32
    %7 = vector.broadcast %cst_5 : f32 to vector<8x128xf32>
    %8 = arith.maximumf %6, %7 : vector<8x128xf32>
    %c0_6 = arith.constant 0 : index
    %c0_7 = arith.constant 0 : index
    %9 = vector.load %arg3[%c0_6, %c0_7] : memref<384x128xbf16, #tpu.memory_space<vmem>>, vector<384x128xbf16>
    %10 = arith.extf %9 : vector<384x128xbf16> to vector<384x128xf32>
    %11 = tpu.transpose %8, [1, 0] : vector<8x128xf32> -> vector<128x8xf32>
    %cst_8 = arith.constant dense<0.000000e+00> : vector<384x8xf32>
    %12 = tpu.matmul %10, %11, %cst_8 {dimension_numbers = #tpu.dot_dimension_numbers<[1], [0], [0], [1], [0, 0, 1, 1], [], []>} : vector<384x128xf32>, vector<128x8xf32>, vector<384x8xf32> -> vector<384x8xf32>
    %c0_9 = arith.constant 0 : index
    %c0_10 = arith.constant 0 : index
    %13 = vector.load %arg4[%c0_9, %c0_10] : memref<384x1xf32, #tpu.memory_space<vmem>>, vector<384x1xf32>
    %14 = vector.broadcast %13 : vector<384x1xf32> to vector<384x8xf32>
    %15 = arith.addf %12, %14 : vector<384x8xf32>
    %16 = vector.extract_strided_slice %15 {offsets = [0, 0], sizes = [128, 8], strides = [1, 1]} : vector<384x8xf32> to vector<128x8xf32>
    %17 = vector.shape_cast %16 : vector<128x8xf32> to vector<4x32x8xf32>
    %18 = vector.extract_strided_slice %15 {offsets = [128, 0], sizes = [128, 8], strides = [1, 1]} : vector<384x8xf32> to vector<128x8xf32>
    %19 = vector.shape_cast %18 : vector<128x8xf32> to vector<4x32x8xf32>
    %20 = vector.extract_strided_slice %15 {offsets = [256, 0], sizes = [128, 8], strides = [1, 1]} : vector<384x8xf32> to vector<128x8xf32>
    %21 = vector.shape_cast %20 : vector<128x8xf32> to vector<4x32x8xf32>
    %22 = tpu.transpose %17, [0, 2, 1] : vector<4x32x8xf32> -> vector<4x8x32xf32>
    "tpu.trace_start"() <{level = 10 : i32, message = "hqd,hdk->hqk"}> : () -> ()
    %cst_11 = arith.constant dense<0.000000e+00> : vector<4x8x8xf32>
    %23 = tpu.matmul %22, %19, %cst_11 {dimension_numbers = #tpu.dot_dimension_numbers<[2], [1], [1], [2], [0, 0, 0, 1, 1, 2], [0], [0]>} : vector<4x8x32xf32>, vector<4x32x8xf32>, vector<4x8x8xf32> -> vector<4x8x8xf32>
    "tpu.trace_stop"() : () -> ()
    %cst_12 = arith.constant dense<0xFF800000> : vector<4x8xf32>
    %24 = vector.multi_reduction <maximumf>, %23, %cst_12 [2] : vector<4x8x8xf32> to vector<4x8xf32>
    %25 = vector.shape_cast %24 : vector<4x8xf32> to vector<4x8x1xf32>
    %26 = vector.broadcast %25 : vector<4x8x1xf32> to vector<4x8x8xf32>
    %27 = arith.subf %23, %26 : vector<4x8x8xf32>
    %28 = math.exp %27 : vector<4x8x8xf32>
    %cst_13 = arith.constant dense<0.000000e+00> : vector<4x8xf32>
    %29 = vector.multi_reduction <add>, %28, %cst_13 [2] : vector<4x8x8xf32> to vector<4x8xf32>
    %30 = vector.shape_cast %29 : vector<4x8xf32> to vector<4x8x1xf32>
    %31 = tpu.reciprocal %30 {approx = true} : vector<4x8x1xf32> -> vector<4x8x1xf32>
    %32 = vector.broadcast %31 : vector<4x8x1xf32> to vector<4x8x8xf32>
    %33 = arith.mulf %28, %32 : vector<4x8x8xf32>
    "tpu.trace_start"() <{level = 10 : i32, message = "hdk,hqk->hdq"}> : () -> ()
    %cst_14 = arith.constant dense<0.000000e+00> : vector<4x32x8xf32>
    %34 = tpu.matmul %21, %33, %cst_14 {dimension_numbers = #tpu.dot_dimension_numbers<[2], [2], [1], [1], [0, 0, 0, 1, 1, 1], [0], [0]>} : vector<4x32x8xf32>, vector<4x8x8xf32>, vector<4x32x8xf32> -> vector<4x32x8xf32>
    "tpu.trace_stop"() : () -> ()
    %35 = vector.shape_cast %34 : vector<4x32x8xf32> to vector<128x8xf32>
    %36 = tpu.transpose %35, [1, 0] : vector<128x8xf32> -> vector<8x128xf32>
    %c0_15 = arith.constant 0 : index
    %c0_16 = arith.constant 0 : index
    %37 = vector.load %arg5[%c0_15, %c0_16] : memref<128x128xbf16, #tpu.memory_space<vmem>>, vector<128x128xbf16>
    %38 = arith.extf %37 : vector<128x128xbf16> to vector<128x128xf32>
    %cst_17 = arith.constant dense<0.000000e+00> : vector<8x128xf32>
    %39 = tpu.matmul %36, %38, %cst_17 {dimension_numbers = #tpu.dot_dimension_numbers<[1], [0], [0], [1], [0, 0, 1, 1], [], []>} : vector<8x128xf32>, vector<128x128xf32>, vector<8x128xf32> -> vector<8x128xf32>
    %c0_18 = arith.constant 0 : index
    %c0_19 = arith.constant 0 : index
    %40 = vector.load %arg6[%c0_18, %c0_19] : memref<1x128xf32, #tpu.memory_space<vmem>>, vector<1x128xf32>
    %41 = vector.broadcast %40 : vector<1x128xf32> to vector<8x128xf32>
    %42 = arith.addf %39, %41 : vector<8x128xf32>
    %cst_20 = arith.constant dense<0xFF800000> : vector<8xf32>
    %43 = vector.multi_reduction <maximumf>, %42, %cst_20 [1] : vector<8x128xf32> to vector<8xf32>
    %44 = vector.shape_cast %43 : vector<8xf32> to vector<8x1xf32>
    %45 = vector.broadcast %44 : vector<8x1xf32> to vector<8x128xf32>
    %46 = arith.subf %42, %45 : vector<8x128xf32>
    %47 = math.exp %46 : vector<8x128xf32>
    %cst_21 = arith.constant dense<0.000000e+00> : vector<8xf32>
    %48 = vector.multi_reduction <add>, %47, %cst_21 [1] : vector<8x128xf32> to vector<8xf32>
    %49 = vector.shape_cast %48 : vector<8xf32> to vector<8x1xf32>
    %50 = tpu.reciprocal %49 {approx = true} : vector<8x1xf32> -> vector<8x1xf32>
    %51 = vector.broadcast %50 : vector<8x1xf32> to vector<8x128xf32>
    %52 = arith.mulf %47, %51 : vector<8x128xf32>
    %c0_22 = arith.constant 0 : index
    %c0_23 = arith.constant 0 : index
    %53 = vector.load %arg7[%c0_22, %c0_23] : memref<8x128xf32, #tpu.memory_space<vmem>>, vector<8x128xf32>
    tpu.vector_store %arg7[%c0_22, %c0_23], %52 {strides = array<i32>} : memref<8x128xf32, #tpu.memory_space<vmem>>, vector<8x128xf32>,
    return
  }
}

</mosaic_0001>

<llo_original>
// kernel: tpu_custom_call.1
$region0: #{tpu_custom_call.1}
  #allocation0 [shape = 'u32[]', space=smem, size = 0x4, offset = 0x4, fixed_abs, tag = 'smem constant byte address 0x4 - core index']
  #allocation1 [shape = 'u32[72,128]{1,0:T(1,128)}', space=vmem, size = 0x9000, scoped, tag = 'internal scratch']
  %s0 = inlined_call_operand.vmem [shape: f32[8,896], index: 0, kind: input, shape index: {}]
  %s1 = inlined_call_operand.hbm [shape: bf16[896,128], index: 1, kind: input, shape index: {}]
  %s2 = inlined_call_operand.vmem [shape: f32[1,128], index: 2, kind: input, shape index: {}]
  %s3 = inlined_call_operand.vmem [shape: bf16[384,128], index: 3, kind: input, shape index: {}]
  %s4 = inlined_call_operand.vmem [shape: f32[384,1], index: 4, kind: input, shape index: {}]
  %s5 = inlined_call_operand.vmem [shape: bf16[128,128], index: 5, kind: input, shape index: {}]
  %s6 = inlined_call_operand.vmem [shape: f32[1,128], index: 6, kind: input, shape index: {}]
  %s7 = inlined_call_operand.hbm [shape: f32[8,128], index: 7, kind: output, shape index: {}]
  %s8 = sld [smem:[#allocation0]]
  $region42: #{tpu_custom_call.1} parent=0
    _
  %s10 = ssub.s32 1, %s8
  %s11 = scalar_select 0, %s10, %s8
  $region1: #{tpu_custom_call.1} parent=0
    #allocation2 [shape = 'u8[229376]{0}', space=vmem, size = 0x38000, scoped, tag = 'input window, operand 1, single buffered']
    #allocation3 [shape = 's32[1]{0}', space=sflag, size = 0x4, scoped, tag = 'scoped memory for tpu_custom_call.1']
    #allocation4 [shape = 's32[1]{0}', space=sflag, size = 0x4, scoped, tag = 'scoped memory for tpu_custom_call.1']
    #allocation5 [shape = 'u8[4096]{0}', space=vmem, size = 0x1000, scoped, tag = 'output window, operand 0, single buffered']
    %12 = vsyncpa [#allocation3], 0
    %13 = vsyncpa [#allocation4], 0
    // Predicated region
    $region2: #{tpu_custom_call.1} parent=1 // pred_check
      _
    $region3: #{tpu_custom_call.1} parent=1 // pred_check_branch
      %15 = sbr.rel (0) target = $region5
    $region4: #{tpu_custom_call.1} parent=1 // pred_region
      _
    $region5: #{tpu_custom_call.1} parent=1 // pred_fallthru
      _
    // Predicated region
    $region6: #{tpu_custom_call.1} parent=1 // pred_check
      _
    $region7: #{tpu_custom_call.1} parent=1 // pred_check_branch
      %17 = sbr.rel (0) target = $region9
    $region8: #{tpu_custom_call.1} parent=1 // pred_region
      %19 = vsyncadd [#allocation3], 0
      %s20 = sshll.u32 %s1, 4
      %s21 = int_to_ptr.hbm [resolvable:$true] %s20
      %s22 = sshll.u32 [#allocation2], 4
      %s23 = int_to_ptr.vmem [resolvable:$true] %s22
      %28 = dma.hbm_to_vmem [thread:$0]  %s21, 7168, %s23, [#allocation3], 64, 64, 4
    $region9: #{tpu_custom_call.1} parent=1 // pred_fallthru
      _
    // Predicated region
    $region10: #{tpu_custom_call.1} parent=1 // pred_check
      _
    $region11: #{tpu_custom_call.1} parent=1 // pred_check_branch
      %30 = sbr.rel (0) target = $region13
    $region12: #{tpu_custom_call.1} parent=1 // pred_region
      _
    $region13: #{tpu_custom_call.1} parent=1 // pred_fallthru
      _
    // Predicated region
    $region14: #{tpu_custom_call.1} parent=1 // pred_check
      _
    $region15: #{tpu_custom_call.1} parent=1 // pred_check_branch
      %32 = sbr.rel (0) target = $region17
    $region16: #{tpu_custom_call.1} parent=1 // pred_region
      _
    $region17: #{tpu_custom_call.1} parent=1 // pred_fallthru
      _
    // Predicated region
    $region18: #{tpu_custom_call.1} parent=1 // pred_check
      _
    $region19: #{tpu_custom_call.1} parent=1 // pred_check_branch
      %34 = sbr.rel (0) target = $region21
    $region20: #{tpu_custom_call.1} parent=1 // pred_region
      _
    $region21: #{tpu_custom_call.1} parent=1 // pred_fallthru
      _
    // Predicated region
    $region22: #{tpu_custom_call.1} parent=1 // pred_check
      _
    $region23: #{tpu_custom_call.1} parent=1 // pred_check_branch
      %36 = sbr.rel (0) target = $region25
    $region24: #{tpu_custom_call.1} parent=1 // pred_region
      _
    $region25: #{tpu_custom_call.1} parent=1 // pred_fallthru
      _
    // Predicated region
    $region26: #{tpu_custom_call.1} parent=1 // pred_check
      _
    $region27: #{tpu_custom_call.1} parent=1 // pred_check_branch
      %38 = sbr.rel (0) target = $region29
    $region28: #{tpu_custom_call.1} parent=1 // pred_region
      _
    $region29: #{tpu_custom_call.1} parent=1 // pred_fallthru
      _
    // Predicated region
    $region30: #{tpu_custom_call.1} parent=1 // pred_check
      _
    $region31: #{tpu_custom_call.1} parent=1 // pred_check_branch
      %40 = sbr.rel (0) target = $region33
    $region32: #{tpu_custom_call.1} parent=1 // pred_region
      %42 = dma.done [#allocation3], 7168
    $region33: #{tpu_custom_call.1} parent=1 // pred_fallthru
      _
    %v43 = vld [vmem:[%s0] sm:$0xff]
    %v44 = vld [vmem:[%s0 + $0x8] sm:$0xff]
    %v45 = vld [vmem:[%s0 + $0x10] sm:$0xff]
    %v46 = vld [vmem:[%s0 + $0x18] sm:$0xff]
    %v47 = vld [vmem:[%s0 + $0x20] sm:$0xff]
    %v48 = vld [vmem:[%s0 + $0x28] sm:$0xff]
    %v49 = vld [vmem:[%s0 + $0x30] sm:$0xff]
    %v50 = vld [vmem:[#allocation2] sm:$0xf]
    %v51 = vld [vmem:[#allocation2 + $0x4] sm:$0xf]
    %v52 = vld [vmem:[#allocation2 + $0x8] sm:$0xf]
    %v53 = vld [vmem:[#allocation2 + $0xc] sm:$0xf]
    %v54 = vld [vmem:[#allocation2 + $0x10] sm:$0xf]
    %v55 = vld [vmem:[#allocation2 + $0x14] sm:$0xf]
    %v56 = vld [vmem:[#allocation2 + $0x18] sm:$0xf]
    %v57 = vld [vmem:[#allocation2 + $0x1c] sm:$0xf]
    %v58 = vld [vmem:[#allocation2 + $0x20] sm:$0xf]
    %v59 = vld [vmem:[#allocation2 + $0x24] sm:$0xf]
    %v60 = vld [vmem:[#allocation2 + $0x28] sm:$0xf]
    %v61 = vld [vmem:[#allocation2 + $0x2c] sm:$0xf]
    %v62 = vld [vmem:[#allocation2 + $0x30] sm:$0xf]
    %v63 = vld [vmem:[#allocation2 + $0x34] sm:$0xf]
    %v64 = vld [vmem:[#allocation2 + $0x38] sm:$0xf]
    %v65 = vld [vmem:[#allocation2 + $0x3c] sm:$0xf]
    %v66 = vld [vmem:[#allocation2 + $0x40] sm:$0xf]
    %v67 = vld [vmem:[#allocation2 + $0x44] sm:$0xf]
    %v68 = vld [vmem:[#allocation2 + $0x48] sm:$0xf]
    %v69 = vld [vmem:[#allocation2 + $0x4c] sm:$0xf]
    %v70 = vld [vmem:[#allocation2 + $0x50] sm:$0xf]
    %v71 = vld [vmem:[#allocation2 + $0x54] sm:$0xf]
    %v72 = vld [vmem:[#allocation2 + $0x58] sm:$0xf]
    %v73 = vld [vmem:[#allocation2 + $0x5c] sm:$0xf]
    %v74 = vld [vmem:[#allocation2 + $0x60] sm:$0xf]
    %v75 = vld [vmem:[#allocation2 + $0x64] sm:$0xf]
    %v76 = vld [vmem:[#allocation2 + $0x68] sm:$0xf]
    %v77 = vld [vmem:[#allocation2 + $0x6c] sm:$0xf]
    %v78 = vld [vmem:[#allocation2 + $0x70] sm:$0xf]
    %v79 = vld [vmem:[#allocation2 + $0x74] sm:$0xf]
    %v80 = vld [vmem:[#allocation2 + $0x78] sm:$0xf]
    %v81 = vld [vmem:[#allocation2 + $0x7c] sm:$0xf]
    %v82 = vld [vmem:[#allocation2 + $0x80] sm:$0xf]
    %v83 = vld [vmem:[#allocation2 + $0x84] sm:$0xf]
    %v84 = vld [vmem:[#allocation2 + $0x88] sm:$0xf]
    %v85 = vld [vmem:[#allocation2 + $0x8c] sm:$0xf]
    %v86 = vld [vmem:[#allocation2 + $0x90] sm:$0xf]
    %v87 = vld [vmem:[#allocation2 + $0x94] sm:$0xf]
    %v88 = vld [vmem:[#allocation2 + $0x98] sm:$0xf]
    %v89 = vld [vmem:[#allocation2 + $0x9c] sm:$0xf]
    %v90 = vld [vmem:[#allocation2 + $0xa0] sm:$0xf]
    %v91 = vld [vmem:[#allocation2 + $0xa4] sm:$0xf]
    %v92 = vld [vmem:[#allocation2 + $0xa8] sm:$0xf]
    %v93 = vld [vmem:[#allocation2 + $0xac] sm:$0xf]
    %v94 = vld [vmem:[#allocation2 + $0xb0] sm:$0xf]
    %v95 = vld [vmem:[#allocation2 + $0xb4] sm:$0xf]
    %v96 = vld [vmem:[#allocation2 + $0xb8] sm:$0xf]
    %v97 = vld [vmem:[#allocation2 + $0xbc] sm:$0xf]
    %v98 = vld [vmem:[#allocation2 + $0xc0] sm:$0xf]
    %v99 = vld [vmem:[#allocation2 + $0xc4] sm:$0xf]
    %v100 = vld [vmem:[#allocation2 + $0xc8] sm:$0xf]
    %v101 = vld [vmem:[#allocation2 + $0xcc] sm:$0xf]
    %v102 = vld [vmem:[#allocation2 + $0xd0] sm:$0xf]
    %v103 = vld [vmem:[#allocation2 + $0xd4] sm:$0xf]
    %v104 = vld [vmem:[#allocation2 + $0xd8] sm:$0xf]
    %v105 = vld [vmem:[#allocation2 + $0xdc] sm:$0xf]
    %v106 = vld [vmem:[#allocation2 + $0xe0] sm:$0xf]
    %v107 = vld [vmem:[#allocation2 + $0xe4] sm:$0xf]
    %v108 = vld [vmem:[#allocation2 + $0xe8] sm:$0xf]
    %v109 = vld [vmem:[#allocation2 + $0xec] sm:$0xf]
    %v110 = vld [vmem:[#allocation2 + $0xf0] sm:$0xf]
    %v111 = vld [vmem:[#allocation2 + $0xf4] sm:$0xf]
    %v112 = vld [vmem:[#allocation2 + $0xf8] sm:$0xf]
    %v113 = vld [vmem:[#allocation2 + $0xfc] sm:$0xf]
    %v114 = vld [vmem:[#allocation2 + $0x100] sm:$0xf]
    %v115 = vld [vmem:[#allocation2 + $0x104] sm:$0xf]
    %v116 = vld [vmem:[#allocation2 + $0x108] sm:$0xf]
    %v117 = vld [vmem:[#allocation2 + $0x10c] sm:$0xf]
    %v118 = vld [vmem:[#allocation2 + $0x110] sm:$0xf]
    %v119 = vld [vmem:[#allocation2 + $0x114] sm:$0xf]
    %v120 = vld [vmem:[#allocation2 + $0x118] sm:$0xf]
    %v121 = vld [vmem:[#allocation2 + $0x11c] sm:$0xf]
    %v122 = vld [vmem:[#allocation2 + $0x120] sm:$0xf]
    %v123 = vld [vmem:[#allocation2 + $0x124] sm:$0xf]
    %v124 = vld [vmem:[#allocation2 + $0x128] sm:$0xf]
    %v125 = vld [vmem:[#allocation2 + $0x12c] sm:$0xf]
    %v126 = vld [vmem:[#allocation2 + $0x130] sm:$0xf]
    %v127 = vld [vmem:[#allocation2 + $0x134] sm:$0xf]
    %v128 = vld [vmem:[#allocation2 + $0x138] sm:$0xf]
    %v129 = vld [vmem:[#allocation2 + $0x13c] sm:$0xf]
    %v130 = vld [vmem:[#allocation2 + $0x140] sm:$0xf]
    %v131 = vld [vmem:[#allocation2 + $0x144] sm:$0xf]
    %v132 = vld [vmem:[#allocation2 + $0x148] sm:$0xf]
    %v133 = vld [vmem:[#allocation2 + $0x14c] sm:$0xf]
    %v134 = vld [vmem:[#allocation2 + $0x150] sm:$0xf]
    %v135 = vld [vmem:[#allocation2 + $0x154] sm:$0xf]
    %v136 = vld [vmem:[#allocation2 + $0x158] sm:$0xf]
    %v137 = vld [vmem:[#allocation2 + $0x15c] sm:$0xf]
    %v138 = vld [vmem:[#allocation2 + $0x160] sm:$0xf]
    %v139 = vld [vmem:[#allocation2 + $0x164] sm:$0xf]
    %v140 = vld [vmem:[#allocation2 + $0x168] sm:$0xf]
    %v141 = vld [vmem:[#allocation2 + $0x16c] sm:$0xf]
    %v142 = vld [vmem:[#allocation2 + $0x170] sm:$0xf]
    %v143 = vld [vmem:[#allocation2 + $0x174] sm:$0xf]
    %v144 = vld [vmem:[#allocation2 + $0x178] sm:$0xf]
    %v145 = vld [vmem:[#allocation2 + $0x17c] sm:$0xf]
    %v146 = vld [vmem:[#allocation2 + $0x180] sm:$0xf]
    %v147 = vld [vmem:[#allocation2 + $0x184] sm:$0xf]
    %v148 = vld [vmem:[#allocation2 + $0x188] sm:$0xf]
    %v149 = vld [vmem:[#allocation2 + $0x18c] sm:$0xf]
    %v150 = vld [vmem:[#allocation2 + $0x190] sm:$0xf]
    %v151 = vld [vmem:[#allocation2 + $0x194] sm:$0xf]
    %v152 = vld [vmem:[#allocation2 + $0x198] sm:$0xf]
    %v153 = vld [vmem:[#allocation2 + $0x19c] sm:$0xf]
    %v154 = vld [vmem:[#allocation2 + $0x1a0] sm:$0xf]
    %v155 = vld [vmem:[#allocation2 + $0x1a4] sm:$0xf]
    %v156 = vld [vmem:[#allocation2 + $0x1a8] sm:$0xf]
    %v157 = vld [vmem:[#allocation2 + $0x1ac] sm:$0xf]
    %v158 = vld [vmem:[#allocation2 + $0x1b0] sm:$0xf]
    %v159 = vld [vmem:[#allocation2 + $0x1b4] sm:$0xf]
    %v160 = vld [vmem:[#allocation2 + $0x1b8] sm:$0xf]
    %v161 = vld [vmem:[#allocation2 + $0x1bc] sm:$0xf]
    %v162 = vunpack.c.l.bf16 %v50
    %v163 = vunpack.c.l.bf16 %v51
    %v164 = vunpack.c.l.bf16 %v52
    %v165 = vunpack.c.l.bf16 %v53
    %v166 = vunpack.c.l.bf16 %v54
    %v167 = vunpack.c.l.bf16 %v55
    %v168 = vunpack.c.l.bf16 %v56
    %v169 = vunpack.c.l.bf16 %v57
    %v170 = vunpack.c.l.bf16 %v58
    %v171 = vunpack.c.l.bf16 %v59
    %v172 = vunpack.c.l.bf16 %v60
    %v173 = vunpack.c.l.bf16 %v61
    %v174 = vunpack.c.l.bf16 %v62
    %v175 = vunpack.c.l.bf16 %v63
    %v176 = vunpack.c.l.bf16 %v64
    %v177 = vunpack.c.l.bf16 %v65
    %v178 = vunpack.c.l.bf16 %v66
    %v179 = vunpack.c.l.bf16 %v67
    %v180 = vunpack.c.l.bf16 %v68
    %v181 = vunpack.c.l.bf16 %v69
    %v182 = vunpack.c.l.bf16 %v70
    %v183 = vunpack.c.l.bf16 %v71
    %v184 = vunpack.c.l.bf16 %v72
    %v185 = vunpack.c.l.bf16 %v73
    %v186 = vunpack.c.l.bf16 %v74
    %v187 = vunpack.c.l.bf16 %v75
    %v188 = vunpack.c.l.bf16 %v76
    %v189 = vunpack.c.l.bf16 %v77
    %v190 = vunpack.c.l.bf16 %v78
    %v191 = vunpack.c.l.bf16 %v79
    %v192 = vunpack.c.l.bf16 %v80
    %v193 = vunpack.c.l.bf16 %v81
    %v194 = vunpack.c.l.bf16 %v82
    %v195 = vunpack.c.l.bf16 %v83
    %v196 = vunpack.c.l.bf16 %v84
    %v197 = vunpack.c.l.bf16 %v85
    %v198 = vunpack.c.l.bf16 %v86
    %v199 = vunpack.c.l.bf16 %v87
    %v200 = vunpack.c.l.bf16 %v88
    %v201 = vunpack.c.l.bf16 %v89
    %v202 = vunpack.c.l.bf16 %v90
    %v203 = vunpack.c.l.bf16 %v91
    %v204 = vunpack.c.l.bf16 %v92
    %v205 = vunpack.c.l.bf16 %v93
    %v206 = vunpack.c.l.bf16 %v94
    %v207 = vunpack.c.l.bf16 %v95
    %v208 = vunpack.c.l.bf16 %v96
    %v209 = vunpack.c.l.bf16 %v97
    %v210 = vunpack.c.l.bf16 %v98
    %v211 = vunpack.c.l.bf16 %v99
    %v212 = vunpack.c.l.bf16 %v100
    %v213 = vunpack.c.l.bf16 %v101
    %v214 = vunpack.c.l.bf16 %v102
    %v215 = vunpack.c.l.bf16 %v103
    %v216 = vunpack.c.l.bf16 %v104
    %v217 = vunpack.c.l.bf16 %v105
    %v218 = vunpack.c.l.bf16 %v106
    %v219 = vunpack.c.l.bf16 %v107
    %v220 = vunpack.c.l.bf16 %v108
    %v221 = vunpack.c.l.bf16 %v109
    %v222 = vunpack.c.l.bf16 %v110
    %v223 = vunpack.c.l.bf16 %v111
    %v224 = vunpack.c.l.bf16 %v112
    %v225 = vunpack.c.l.bf16 %v113
    %v226 = vunpack.c.l.bf16 %v114
    %v227 = vunpack.c.l.bf16 %v115
    %v228 = vunpack.c.l.bf16 %v116
    %v229 = vunpack.c.l.bf16 %v117
    %v230 = vunpack.c.l.bf16 %v118
    %v231 = vunpack.c.l.bf16 %v119
    %v232 = vunpack.c.l.bf16 %v120
    %v233 = vunpack.c.l.bf16 %v121
    %v234 = vunpack.c.l.bf16 %v122
    %v235 = vunpack.c.l.bf16 %v123
    %v236 = vunpack.c.l.bf16 %v124
    %v237 = vunpack.c.l.bf16 %v125
    %v238 = vunpack.c.l.bf16 %v126
    %v239 = vunpack.c.l.bf16 %v127
    %v240 = vunpack.c.l.bf16 %v128
    %v241 = vunpack.c.l.bf16 %v129
    %v242 = vunpack.c.l.bf16 %v130
    %v243 = vunpack.c.l.bf16 %v131
    %v244 = vunpack.c.l.bf16 %v132
    %v245 = vunpack.c.l.bf16 %v133
    %v246 = vunpack.c.l.bf16 %v134
    %v247 = vunpack.c.l.bf16 %v135
    %v248 = vunpack.c.l.bf16 %v136
    %v249 = vunpack.c.l.bf16 %v137
    %v250 = vunpack.c.l.bf16 %v138
    %v251 = vunpack.c.l.bf16 %v139
    %v252 = vunpack.c.l.bf16 %v140
    %v253 = vunpack.c.l.bf16 %v141
    %v254 = vunpack.c.l.bf16 %v142
    %v255 = vunpack.c.l.bf16 %v143
    %v256 = vunpack.c.l.bf16 %v144
    %v257 = vunpack.c.l.bf16 %v145
    %v258 = vunpack.c.l.bf16 %v146
    %v259 = vunpack.c.l.bf16 %v147
    %v260 = vunpack.c.l.bf16 %v148
    %v261 = vunpack.c.l.bf16 %v149
    %v262 = vunpack.c.l.bf16 %v150
    %v263 = vunpack.c.l.bf16 %v151
    %v264 = vunpack.c.l.bf16 %v152
    %v265 = vunpack.c.l.bf16 %v153
    %v266 = vunpack.c.l.bf16 %v154
    %v267 = vunpack.c.l.bf16 %v155
    %v268 = vunpack.c.l.bf16 %v156
    %v269 = vunpack.c.l.bf16 %v157
    %v270 = vunpack.c.l.bf16 %v158
    %v271 = vunpack.c.l.bf16 %v159
    %v272 = vunpack.c.l.bf16 %v160
    %v273 = vunpack.c.l.bf16 %v161
    %v274 = vld [vmem:[%s2] sm:$0x1]
    %v276 = vperm.slane %v274, 0
    %278 = vmatpush.msra.mxu0 %v177
    %279 = vmatpush.msra.mxu0 %v176
    %280 = vmatpush.msra.mxu0 %v175
    %281 = vmatpush.msra.mxu0 %v174
    %282 = vmatpush.msra.mxu0 %v173
    %283 = vmatpush.msra.mxu0 %v172
    %284 = vmatpush.msra.mxu0 %v171
    %285 = vmatpush.msra.mxu0 %v170
    %286 = vmatpush.msra.mxu0 %v169
    %287 = vmatpush.msra.mxu0 %v168
    %288 = vmatpush.msra.mxu0 %v167
    %289 = vmatpush.msra.mxu0 %v166
    %290 = vmatpush.msra.mxu0 %v165
    %291 = vmatpush.msra.mxu0 %v164
    %292 = vmatpush.msra.mxu0 %v163
    %293 = vmatpush.msra.mxu0 %v162
    %294 = vmatmul.f32.gmra.mxu0 %v43
    %v295 = vpop.f32.mrf.mxu0
    %v296 = vadd.f32 %v276, %v295
    %297 = vdwg.mxu0
    %298 = vmatpush.msra.mxu0 %v193
    %299 = vmatpush.msra.mxu0 %v192
    %300 = vmatpush.msra.mxu0 %v191
    %301 = vmatpush.msra.mxu0 %v190
    %302 = vmatpush.msra.mxu0 %v189
    %303 = vmatpush.msra.mxu0 %v188
    %304 = vmatpush.msra.mxu0 %v187
    %305 = vmatpush.msra.mxu0 %v186
    %306 = vmatpush.msra.mxu0 %v185
    %307 = vmatpush.msra.mxu0 %v184
    %308 = vmatpush.msra.mxu0 %v183
    %309 = vmatpush.msra.mxu0 %v182
    %310 = vmatpush.msra.mxu0 %v181
    %311 = vmatpush.msra.mxu0 %v180
    %312 = vmatpush.msra.mxu0 %v179
    %313 = vmatpush.msra.mxu0 %v178
    %314 = vmatmul.f32.gmra.mxu0 %v44
    %v315 = vpop.f32.mrf.mxu0
    %v316 = vadd.f32 %v296, %v315
    %317 = vdwg.mxu0
    %318 = vmatpush.msra.mxu0 %v209
    %319 = vmatpush.msra.mxu0 %v208
    %320 = vmatpush.msra.mxu0 %v207
    %321 = vmatpush.msra.mxu0 %v206
    %322 = vmatpush.msra.mxu0 %v205
    %323 = vmatpush.msra.mxu0 %v204
    %324 = vmatpush.msra.mxu0 %v203
    %325 = vmatpush.msra.mxu0 %v202
    %326 = vmatpush.msra.mxu0 %v201
    %327 = vmatpush.msra.mxu0 %v200
    %328 = vmatpush.msra.mxu0 %v199
    %329 = vmatpush.msra.mxu0 %v198
    %330 = vmatpush.msra.mxu0 %v197
    %331 = vmatpush.msra.mxu0 %v196
    %332 = vmatpush.msra.mxu0 %v195
    %333 = vmatpush.msra.mxu0 %v194
    %334 = vmatmul.f32.gmra.mxu0 %v45
    %v335 = vpop.f32.mrf.mxu0
    %v336 = vadd.f32 %v316, %v335
    %337 = vdwg.mxu0
    %338 = vmatpush.msra.mxu0 %v225
    %339 = vmatpush.msra.mxu0 %v224
    %340 = vmatpush.msra.mxu0 %v223
    %341 = vmatpush.msra.mxu0 %v222
    %342 = vmatpush.msra.mxu0 %v221
    %343 = vmatpush.msra.mxu0 %v220
    %344 = vmatpush.msra.mxu0 %v219
    %345 = vmatpush.msra.mxu0 %v218
    %346 = vmatpush.msra.mxu0 %v217
    %347 = vmatpush.msra.mxu0 %v216
    %348 = vmatpush.msra.mxu0 %v215
    %349 = vmatpush.msra.mxu0 %v214
    %350 = vmatpush.msra.mxu0 %v213
    %351 = vmatpush.msra.mxu0 %v212
    %352 = vmatpush.msra.mxu0 %v211
    %353 = vmatpush.msra.mxu0 %v210
    %354 = vmatmul.f32.gmra.mxu0 %v46
    %v355 = vpop.f32.mrf.mxu0
    %v356 = vadd.f32 %v336, %v355
    %357 = vdwg.mxu0
    %358 = vmatpush.msra.mxu0 %v241
    %359 = vmatpush.msra.mxu0 %v240
    %360 = vmatpush.msra.mxu0 %v239
    %361 = vmatpush.msra.mxu0 %v238
    %362 = vmatpush.msra.mxu0 %v237
    %363 = vmatpush.msra.mxu0 %v236
    %364 = vmatpush.msra.mxu0 %v235
    %365 = vmatpush.msra.mxu0 %v234
    %366 = vmatpush.msra.mxu0 %v233
    %367 = vmatpush.msra.mxu0 %v232
    %368 = vmatpush.msra.mxu0 %v231
    %369 = vmatpush.msra.mxu0 %v230
    %370 = vmatpush.msra.mxu0 %v229
    %371 = vmatpush.msra.mxu0 %v228
    %372 = vmatpush.msra.mxu0 %v227
    %373 = vmatpush.msra.mxu0 %v226
    %374 = vmatmul.f32.gmra.mxu0 %v47
    %v375 = vpop.f32.mrf.mxu0
    %v376 = vadd.f32 %v356, %v375
    %377 = vdwg.mxu0
    %378 = vmatpush.msra.mxu0 %v257
    %379 = vmatpush.msra.mxu0 %v256
    %380 = vmatpush.msra.mxu0 %v255
    %381 = vmatpush.msra.mxu0 %v254
    %382 = vmatpush.msra.mxu0 %v253
    %383 = vmatpush.msra.mxu0 %v252
    %384 = vmatpush.msra.mxu0 %v251
    %385 = vmatpush.msra.mxu0 %v250
    %386 = vmatpush.msra.mxu0 %v249
    %387 = vmatpush.msra.mxu0 %v248
    %388 = vmatpush.msra.mxu0 %v247
    %389 = vmatpush.msra.mxu0 %v246
    %390 = vmatpush.msra.mxu0 %v245
    %391 = vmatpush.msra.mxu0 %v244
    %392 = vmatpush.msra.mxu0 %v243
    %393 = vmatpush.msra.mxu0 %v242
    %394 = vmatmul.f32.gmra.mxu0 %v48
    %v395 = vpop.f32.mrf.mxu0
    %v396 = vadd.f32 %v376, %v395
    %397 = vdwg.mxu0
    %398 = vmatpush.msra.mxu0 %v273
    %399 = vmatpush.msra.mxu0 %v272
    %400 = vmatpush.msra.mxu0 %v271
    %401 = vmatpush.msra.mxu0 %v270
    %402 = vmatpush.msra.mxu0 %v269
    %403 = vmatpush.msra.mxu0 %v268
    %404 = vmatpush.msra.mxu0 %v267
    %405 = vmatpush.msra.mxu0 %v266
    %406 = vmatpush.msra.mxu0 %v265
    %407 = vmatpush.msra.mxu0 %v264
    %408 = vmatpush.msra.mxu0 %v263
    %409 = vmatpush.msra.mxu0 %v262
    %410 = vmatpush.msra.mxu0 %v261
    %411 = vmatpush.msra.mxu0 %v260
    %412 = vmatpush.msra.mxu0 %v259
    %413 = vmatpush.msra.mxu0 %v258
    %414 = vmatmul.f32.gmra.mxu0 %v49
    %v415 = vpop.f32.mrf.mxu0
    %v416 = vadd.f32 %v396, %v415
    %417 = vdwg.mxu0
    %v418 = vmax.f32 %v416, 0.0
    %v419 = vld [vmem:[%s3] sm:$0xf]
    %v420 = vld [vmem:[%s3 + $0x4] sm:$0xf]
    %v421 = vld [vmem:[%s3 + $0x8] sm:$0xf]
    %v422 = vld [vmem:[%s3 + $0xc] sm:$0xf]
    %v423 = vld [vmem:[%s3 + $0x10] sm:$0xf]
    %v424 = vld [vmem:[%s3 + $0x14] sm:$0xf]
    %v425 = vld [vmem:[%s3 + $0x18] sm:$0xf]
    %v426 = vld [vmem:[%s3 + $0x1c] sm:$0xf]
    %v427 = vld [vmem:[%s3 + $0x20] sm:$0xf]
    %v428 = vld [vmem:[%s3 + $0x24] sm:$0xf]
    %v429 = vld [vmem:[%s3 + $0x28] sm:$0xf]
    %v430 = vld [vmem:[%s3 + $0x2c] sm:$0xf]
    %v431 = vld [vmem:[%s3 + $0x30] sm:$0xf]
    %v432 = vld [vmem:[%s3 + $0x34] sm:$0xf]
    %v433 = vld [vmem:[%s3 + $0x38] sm:$0xf]
    %v434 = vld [vmem:[%s3 + $0x3c] sm:$0xf]
    %v435 = vld [vmem:[%s3 + $0x40] sm:$0xf]
    %v436 = vld [vmem:[%s3 + $0x44] sm:$0xf]
    %v437 = vld [vmem:[%s3 + $0x48] sm:$0xf]
    %v438 = vld [vmem:[%s3 + $0x4c] sm:$0xf]
    %v439 = vld [vmem:[%s3 + $0x50] sm:$0xf]
    %v440 = vld [vmem:[%s3 + $0x54] sm:$0xf]
    %v441 = vld [vmem:[%s3 + $0x58] sm:$0xf]
    %v442 = vld [vmem:[%s3 + $0x5c] sm:$0xf]
    %v443 = vld [vmem:[%s3 + $0x60] sm:$0xf]
    %v444 = vld [vmem:[%s3 + $0x64] sm:$0xf]
    %v445 = vld [vmem:[%s3 + $0x68] sm:$0xf]
    %v446 = vld [vmem:[%s3 + $0x6c] sm:$0xf]
    %v447 = vld [vmem:[%s3 + $0x70] sm:$0xf]
    %v448 = vld [vmem:[%s3 + $0x74] sm:$0xf]
    %v449 = vld [vmem:[%s3 + $0x78] sm:$0xf]
    %v450 = vld [vmem:[%s3 + $0x7c] sm:$0xf]
    %v451 = vld [vmem:[%s3 + $0x80] sm:$0xf]
    %v452 = vld [vmem:[%s3 + $0x84] sm:$0xf]
    %v453 = vld [vmem:[%s3 + $0x88] sm:$0xf]
    %v454 = vld [vmem:[%s3 + $0x8c] sm:$0xf]
    %v455 = vld [vmem:[%s3 + $0x90] sm:$0xf]
    %v456 = vld [vmem:[%s3 + $0x94] sm:$0xf]
    %v457 = vld [vmem:[%s3 + $0x98] sm:$0xf]
    %v458 = vld [vmem:[%s3 + $0x9c] sm:$0xf]
    %v459 = vld [vmem:[%s3 + $0xa0] sm:$0xf]
    %v460 = vld [vmem:[%s3 + $0xa4] sm:$0xf]
    %v461 = vld [vmem:[%s3 + $0xa8] sm:$0xf]
    %v462 = vld [vmem:[%s3 + $0xac] sm:$0xf]
    %v463 = vld [vmem:[%s3 + $0xb0] sm:$0xf]
    %v464 = vld [vmem:[%s3 + $0xb4] sm:$0xf]
    %v465 = vld [vmem:[%s3 + $0xb8] sm:$0xf]
    %v466 = vld [vmem:[%s3 + $0xbc] sm:$0xf]
    %v467 = vunpack.c.l.bf16 %v419
    %v468 = vunpack.c.l.bf16 %v420
    %v469 = vunpack.c.l.bf16 %v421
    %v470 = vunpack.c.l.bf16 %v422
    %v471 = vunpack.c.l.bf16 %v423
    %v472 = vunpack.c.l.bf16 %v424
    %v473 = vunpack.c.l.bf16 %v425
    %v474 = vunpack.c.l.bf16 %v426
    %v475 = vunpack.c.l.bf16 %v427
    %v476 = vunpack.c.l.bf16 %v428
    %v477 = vunpack.c.l.bf16 %v429
    %v478 = vunpack.c.l.bf16 %v430
    %v479 = vunpack.c.l.bf16 %v431
    %v480 = vunpack.c.l.bf16 %v432
    %v481 = vunpack.c.l.bf16 %v433
    %v482 = vunpack.c.l.bf16 %v434
    %v483 = vunpack.c.l.bf16 %v435
    %v484 = vunpack.c.l.bf16 %v436
    %v485 = vunpack.c.l.bf16 %v437
    %v486 = vunpack.c.l.bf16 %v438
    %v487 = vunpack.c.l.bf16 %v439
    %v488 = vunpack.c.l.bf16 %v440
    %v489 = vunpack.c.l.bf16 %v441
    %v490 = vunpack.c.l.bf16 %v442
    %v491 = vunpack.c.l.bf16 %v443
    %v492 = vunpack.c.l.bf16 %v444
    %v493 = vunpack.c.l.bf16 %v445
    %v494 = vunpack.c.l.bf16 %v446
    %v495 = vunpack.c.l.bf16 %v447
    %v496 = vunpack.c.l.bf16 %v448
    %v497 = vunpack.c.l.bf16 %v449
    %v498 = vunpack.c.l.bf16 %v450
    %v499 = vunpack.c.l.bf16 %v451
    %v500 = vunpack.c.l.bf16 %v452
    %v501 = vunpack.c.l.bf16 %v453
    %v502 = vunpack.c.l.bf16 %v454
    %v503 = vunpack.c.l.bf16 %v455
    %v504 = vunpack.c.l.bf16 %v456
    %v505 = vunpack.c.l.bf16 %v457
    %v506 = vunpack.c.l.bf16 %v458
    %v507 = vunpack.c.l.bf16 %v459
    %v508 = vunpack.c.l.bf16 %v460
    %v509 = vunpack.c.l.bf16 %v461
    %v510 = vunpack.c.l.bf16 %v462
    %v511 = vunpack.c.l.bf16 %v463
    %v512 = vunpack.c.l.bf16 %v464
    %v513 = vunpack.c.l.bf16 %v465
    %v514 = vunpack.c.l.bf16 %v466
    %v515 = vld [vmem:[%s4] sm:$0xff]
    %v516 = vld [vmem:[%s4 + $0x8] sm:$0xff]
    %v517 = vld [vmem:[%s4 + $0x10] sm:$0xff]
    %v518 = vld [vmem:[%s4 + $0x18] sm:$0xff]
    %v519 = vld [vmem:[%s4 + $0x20] sm:$0xff]
    %v520 = vld [vmem:[%s4 + $0x28] sm:$0xff]
    %v521 = vld [vmem:[%s4 + $0x30] sm:$0xff]
    %v522 = vld [vmem:[%s4 + $0x38] sm:$0xff]
    %v523 = vld [vmem:[%s4 + $0x40] sm:$0xff]
    %v524 = vld [vmem:[%s4 + $0x48] sm:$0xff]
    %v525 = vld [vmem:[%s4 + $0x50] sm:$0xff]
    %v526 = vld [vmem:[%s4 + $0x58] sm:$0xff]
    %v527 = vld [vmem:[%s4 + $0x60] sm:$0xff]
    %v528 = vld [vmem:[%s4 + $0x68] sm:$0xff]
    %v529 = vld [vmem:[%s4 + $0x70] sm:$0xff]
    %v530 = vld [vmem:[%s4 + $0x78] sm:$0xff]
    %v531 = vld [vmem:[%s4 + $0x80] sm:$0xff]
    %v532 = vld [vmem:[%s4 + $0x88] sm:$0xff]
    %v533 = vld [vmem:[%s4 + $0x90] sm:$0xff]
    %v534 = vld [vmem:[%s4 + $0x98] sm:$0xff]
    %v535 = vld [vmem:[%s4 + $0xa0] sm:$0xff]
    %v536 = vld [vmem:[%s4 + $0xa8] sm:$0xff]
    %v537 = vld [vmem:[%s4 + $0xb0] sm:$0xff]
    %v538 = vld [vmem:[%s4 + $0xb8] sm:$0xff]
    %v539 = vld [vmem:[%s4 + $0xc0] sm:$0xff]
    %v540 = vld [vmem:[%s4 + $0xc8] sm:$0xff]
    %v541 = vld [vmem:[%s4 + $0xd0] sm:$0xff]
    %v542 = vld [vmem:[%s4 + $0xd8] sm:$0xff]
    %v543 = vld [vmem:[%s4 + $0xe0] sm:$0xff]
    %v544 = vld [vmem:[%s4 + $0xe8] sm:$0xff]
    %v545 = vld [vmem:[%s4 + $0xf0] sm:$0xff]
    %v546 = vld [vmem:[%s4 + $0xf8] sm:$0xff]
    %v547 = vld [vmem:[%s4 + $0x100] sm:$0xff]
    %v548 = vld [vmem:[%s4 + $0x108] sm:$0xff]
    %v549 = vld [vmem:[%s4 + $0x110] sm:$0xff]
    %v550 = vld [vmem:[%s4 + $0x118] sm:$0xff]
    %v551 = vld [vmem:[%s4 + $0x120] sm:$0xff]
    %v552 = vld [vmem:[%s4 + $0x128] sm:$0xff]
    %v553 = vld [vmem:[%s4 + $0x130] sm:$0xff]
    %v554 = vld [vmem:[%s4 + $0x138] sm:$0xff]
    %v555 = vld [vmem:[%s4 + $0x140] sm:$0xff]
    %v556 = vld [vmem:[%s4 + $0x148] sm:$0xff]
    %v557 = vld [vmem:[%s4 + $0x150] sm:$0xff]
    %v558 = vld [vmem:[%s4 + $0x158] sm:$0xff]
    %v559 = vld [vmem:[%s4 + $0x160] sm:$0xff]
    %v560 = vld [vmem:[%s4 + $0x168] sm:$0xff]
    %v561 = vld [vmem:[%s4 + $0x170] sm:$0xff]
    %v562 = vld [vmem:[%s4 + $0x178] sm:$0xff]
    %564 = vset.pattern.permute.xlu0 0
    %565 = vperm.xlu0 %564, %v515
    %v566 = vpop.permute.xlu0 %565
    %569 = vset.pattern.permute.xlu0 0
    %570 = vperm.xlu0 %569, %v516
    %v571 = vpop.permute.xlu0 %570
    %574 = vset.pattern.permute.xlu0 0
    %575 = vperm.xlu0 %574, %v517
    %v576 = vpop.permute.xlu0 %575
    %579 = vset.pattern.permute.xlu0 0
    %580 = vperm.xlu0 %579, %v518
    %v581 = vpop.permute.xlu0 %580
    %584 = vset.pattern.permute.xlu0 0
    %585 = vperm.xlu0 %584, %v519
    %v586 = vpop.permute.xlu0 %585
    %589 = vset.pattern.permute.xlu0 0
    %590 = vperm.xlu0 %589, %v520
    %v591 = vpop.permute.xlu0 %590
    %594 = vset.pattern.permute.xlu0 0
    %595 = vperm.xlu0 %594, %v521
    %v596 = vpop.permute.xlu0 %595
    %599 = vset.pattern.permute.xlu0 0
    %600 = vperm.xlu0 %599, %v522
    %v601 = vpop.permute.xlu0 %600
    %604 = vset.pattern.permute.xlu0 0
    %605 = vperm.xlu0 %604, %v523
    %v606 = vpop.permute.xlu0 %605
    %609 = vset.pattern.permute.xlu0 0
    %610 = vperm.xlu0 %609, %v524
    %v611 = vpop.permute.xlu0 %610
    %614 = vset.pattern.permute.xlu0 0
    %615 = vperm.xlu0 %614, %v525
    %v616 = vpop.permute.xlu0 %615
    %619 = vset.pattern.permute.xlu0 0
    %620 = vperm.xlu0 %619, %v526
    %v621 = vpop.permute.xlu0 %620
    %624 = vset.pattern.permute.xlu0 0
    %625 = vperm.xlu0 %624, %v527
    %v626 = vpop.permute.xlu0 %625
    %629 = vset.pattern.permute.xlu0 0
    %630 = vperm.xlu0 %629, %v528
    %v631 = vpop.permute.xlu0 %630
    %634 = vset.pattern.permute.xlu0 0
    %635 = vperm.xlu0 %634, %v529
    %v636 = vpop.permute.xlu0 %635
    %639 = vset.pattern.permute.xlu0 0
    %640 = vperm.xlu0 %639, %v530
    %v641 = vpop.permute.xlu0 %640
    %644 = vset.pattern.permute.xlu0 0
    %645 = vperm.xlu0 %644, %v531
    %v646 = vpop.permute.xlu0 %645
    %649 = vset.pattern.permute.xlu0 0
    %650 = vperm.xlu0 %649, %v532
    %v651 = vpop.permute.xlu0 %650
    %654 = vset.pattern.permute.xlu0 0
    %655 = vperm.xlu0 %654, %v533
    %v656 = vpop.permute.xlu0 %655
    %659 = vset.pattern.permute.xlu0 0
    %660 = vperm.xlu0 %659, %v534
    %v661 = vpop.permute.xlu0 %660
    %664 = vset.pattern.permute.xlu0 0
    %665 = vperm.xlu0 %664, %v535
    %v666 = vpop.permute.xlu0 %665
    %669 = vset.pattern.permute.xlu0 0
    %670 = vperm.xlu0 %669, %v536
    %v671 = vpop.permute.xlu0 %670
    %674 = vset.pattern.permute.xlu0 0
    %675 = vperm.xlu0 %674, %v537
    %v676 = vpop.permute.xlu0 %675
    %679 = vset.pattern.permute.xlu0 0
    %680 = vperm.xlu0 %679, %v538
    %v681 = vpop.permute.xlu0 %680
    %684 = vset.pattern.permute.xlu0 0
    %685 = vperm.xlu0 %684, %v539
    %v686 = vpop.permute.xlu0 %685
    %689 = vset.pattern.permute.xlu0 0
    %690 = vperm.xlu0 %689, %v540
    %v691 = vpop.permute.xlu0 %690
    %694 = vset.pattern.permute.xlu0 0
    %695 = vperm.xlu0 %694, %v541
    %v696 = vpop.permute.xlu0 %695
    %699 = vset.pattern.permute.xlu0 0
    %700 = vperm.xlu0 %699, %v542
    %v701 = vpop.permute.xlu0 %700
    %704 = vset.pattern.permute.xlu0 0
    %705 = vperm.xlu0 %704, %v543
    %v706 = vpop.permute.xlu0 %705
    %709 = vset.pattern.permute.xlu0 0
    %710 = vperm.xlu0 %709, %v544
    %v711 = vpop.permute.xlu0 %710
    %714 = vset.pattern.permute.xlu0 0
    %715 = vperm.xlu0 %714, %v545
    %v716 = vpop.permute.xlu0 %715
    %719 = vset.pattern.permute.xlu0 0
    %720 = vperm.xlu0 %719, %v546
    %v721 = vpop.permute.xlu0 %720
    %724 = vset.pattern.permute.xlu0 0
    %725 = vperm.xlu0 %724, %v547
    %v726 = vpop.permute.xlu0 %725
    %729 = vset.pattern.permute.xlu0 0
    %730 = vperm.xlu0 %729, %v548
    %v731 = vpop.permute.xlu0 %730
    %734 = vset.pattern.permute.xlu0 0
    %735 = vperm.xlu0 %734, %v549
    %v736 = vpop.permute.xlu0 %735
    %739 = vset.pattern.permute.xlu0 0
    %740 = vperm.xlu0 %739, %v550
    %v741 = vpop.permute.xlu0 %740
    %744 = vset.pattern.permute.xlu0 0
    %745 = vperm.xlu0 %744, %v551
    %v746 = vpop.permute.xlu0 %745
    %749 = vset.pattern.permute.xlu0 0
    %750 = vperm.xlu0 %749, %v552
    %v751 = vpop.permute.xlu0 %750
    %754 = vset.pattern.permute.xlu0 0
    %755 = vperm.xlu0 %754, %v553
    %v756 = vpop.permute.xlu0 %755
    %759 = vset.pattern.permute.xlu0 0
    %760 = vperm.xlu0 %759, %v554
    %v761 = vpop.permute.xlu0 %760
    %764 = vset.pattern.permute.xlu0 0
    %765 = vperm.xlu0 %764, %v555
    %v766 = vpop.permute.xlu0 %765
    %769 = vset.pattern.permute.xlu0 0
    %770 = vperm.xlu0 %769, %v556
    %v771 = vpop.permute.xlu0 %770
    %774 = vset.pattern.permute.xlu0 0
    %775 = vperm.xlu0 %774, %v557
    %v776 = vpop.permute.xlu0 %775
    %779 = vset.pattern.permute.xlu0 0
    %780 = vperm.xlu0 %779, %v558
    %v781 = vpop.permute.xlu0 %780
    %784 = vset.pattern.permute.xlu0 0
    %785 = vperm.xlu0 %784, %v559
    %v786 = vpop.permute.xlu0 %785
    %789 = vset.pattern.permute.xlu0 0
    %790 = vperm.xlu0 %789, %v560
    %v791 = vpop.permute.xlu0 %790
    %794 = vset.pattern.permute.xlu0 0
    %795 = vperm.xlu0 %794, %v561
    %v796 = vpop.permute.xlu0 %795
    %799 = vset.pattern.permute.xlu0 0
    %800 = vperm.xlu0 %799, %v562
    %v801 = vpop.permute.xlu0 %800
    %803 = vmatpush.xpose.msra.mxu0 0.0
    %804 = vmatpush.xpose.msra.mxu0 0.0
    %805 = vmatpush.xpose.msra.mxu0 0.0
    %806 = vmatpush.xpose.msra.mxu0 0.0
    %807 = vmatpush.xpose.msra.mxu0 0.0
    %808 = vmatpush.xpose.msra.mxu0 0.0
    %809 = vmatpush.xpose.msra.mxu0 0.0
    %810 = vmatpush.xpose.msra.mxu0 0.0
    %811 = vmatpush.xpose.msra.mxu0 0.0
    %812 = vmatpush.xpose.msra.mxu0 0.0
    %813 = vmatpush.xpose.msra.mxu0 0.0
    %814 = vmatpush.xpose.msra.mxu0 0.0
    %815 = vmatpush.xpose.msra.mxu0 0.0
    %816 = vmatpush.xpose.msra.mxu0 0.0
    %817 = vmatpush.xpose.msra.mxu0 0.0
    %818 = vmatpush.xpose.msra.mxu0 %v418
    %819 = vmatmul.f32.gmra.mxu0 %v467
    %v820 = vpop.f32.mrf.mxu0
    %v821 = vadd.f32 %v566, %v820
    %822 = vmatmul.f32.gmra.mxu0 %v468
    %v823 = vpop.f32.mrf.mxu0
    %v824 = vadd.f32 %v571, %v823
    %825 = vmatmul.f32.gmra.mxu0 %v469
    %v826 = vpop.f32.mrf.mxu0
    %v827 = vadd.f32 %v576, %v826
    %828 = vmatmul.f32.gmra.mxu0 %v470
    %v829 = vpop.f32.mrf.mxu0
    %v830 = vadd.f32 %v581, %v829
    %831 = vmatmul.f32.gmra.mxu0 %v471
    %v832 = vpop.f32.mrf.mxu0
    %v833 = vadd.f32 %v586, %v832
    %834 = vmatmul.f32.gmra.mxu0 %v472
    %v835 = vpop.f32.mrf.mxu0
    %v836 = vadd.f32 %v591, %v835
    %837 = vmatmul.f32.gmra.mxu0 %v473
    %v838 = vpop.f32.mrf.mxu0
    %v839 = vadd.f32 %v596, %v838
    %840 = vmatmul.f32.gmra.mxu0 %v474
    %v841 = vpop.f32.mrf.mxu0
    %v842 = vadd.f32 %v601, %v841
    %843 = vmatmul.f32.gmra.mxu0 %v475
    %v844 = vpop.f32.mrf.mxu0
    %v845 = vadd.f32 %v606, %v844
    %846 = vmatmul.f32.gmra.mxu0 %v476
    %v847 = vpop.f32.mrf.mxu0
    %v848 = vadd.f32 %v611, %v847
    %849 = vmatmul.f32.gmra.mxu0 %v477
    %v850 = vpop.f32.mrf.mxu0
    %v851 = vadd.f32 %v616, %v850
    %852 = vmatmul.f32.gmra.mxu0 %v478
    %v853 = vpop.f32.mrf.mxu0
    %v854 = vadd.f32 %v621, %v853
    %855 = vmatmul.f32.gmra.mxu0 %v479
    %v856 = vpop.f32.mrf.mxu0
    %v857 = vadd.f32 %v626, %v856
    %858 = vmatmul.f32.gmra.mxu0 %v480
    %v859 = vpop.f32.mrf.mxu0
    %v860 = vadd.f32 %v631, %v859
    %861 = vmatmul.f32.gmra.mxu0 %v481
    %v862 = vpop.f32.mrf.mxu0
    %v863 = vadd.f32 %v636, %v862
    %864 = vmatmul.f32.gmra.mxu0 %v482
    %v865 = vpop.f32.mrf.mxu0
    %v866 = vadd.f32 %v641, %v865
    %867 = vmatmul.f32.gmra.mxu0 %v483
    %v868 = vpop.f32.mrf.mxu0
    %v869 = vadd.f32 %v646, %v868
    %870 = vmatmul.f32.gmra.mxu0 %v484
    %v871 = vpop.f32.mrf.mxu0
    %v872 = vadd.f32 %v651, %v871
    %873 = vmatmul.f32.gmra.mxu0 %v485
    %v874 = vpop.f32.mrf.mxu0
    %v875 = vadd.f32 %v656, %v874
    %876 = vmatmul.f32.gmra.mxu0 %v486
    %v877 = vpop.f32.mrf.mxu0
    %v878 = vadd.f32 %v661, %v877
    %879 = vmatmul.f32.gmra.mxu0 %v487
    %v880 = vpop.f32.mrf.mxu0
    %v881 = vadd.f32 %v666, %v880
    %882 = vmatmul.f32.gmra.mxu0 %v488
    %v883 = vpop.f32.mrf.mxu0
    %v884 = vadd.f32 %v671, %v883
    %885 = vmatmul.f32.gmra.mxu0 %v489
    %v886 = vpop.f32.mrf.mxu0
    %v887 = vadd.f32 %v676, %v886
    %888 = vmatmul.f32.gmra.mxu0 %v490
    %v889 = vpop.f32.mrf.mxu0
    %v890 = vadd.f32 %v681, %v889
    %891 = vmatmul.f32.gmra.mxu0 %v491
    %v892 = vpop.f32.mrf.mxu0
    %v893 = vadd.f32 %v686, %v892
    %894 = vmatmul.f32.gmra.mxu0 %v492
    %v895 = vpop.f32.mrf.mxu0
    %v896 = vadd.f32 %v691, %v895
    %897 = vmatmul.f32.gmra.mxu0 %v493
    %v898 = vpop.f32.mrf.mxu0
    %v899 = vadd.f32 %v696, %v898
    %900 = vmatmul.f32.gmra.mxu0 %v494
    %v901 = vpop.f32.mrf.mxu0
    %v902 = vadd.f32 %v701, %v901
    %903 = vmatmul.f32.gmra.mxu0 %v495
    %v904 = vpop.f32.mrf.mxu0
    %v905 = vadd.f32 %v706, %v904
    %906 = vmatmul.f32.gmra.mxu0 %v496
    %v907 = vpop.f32.mrf.mxu0
    %v908 = vadd.f32 %v711, %v907
    %909 = vmatmul.f32.gmra.mxu0 %v497
    %v910 = vpop.f32.mrf.mxu0
    %v911 = vadd.f32 %v716, %v910
    %912 = vmatmul.f32.gmra.mxu0 %v498
    %v913 = vpop.f32.mrf.mxu0
    %v914 = vadd.f32 %v721, %v913
    %915 = vmatmul.f32.gmra.mxu0 %v499
    %v916 = vpop.f32.mrf.mxu0
    %v917 = vadd.f32 %v726, %v916
    %918 = vmatmul.f32.gmra.mxu0 %v500
    %v919 = vpop.f32.mrf.mxu0
    %v920 = vadd.f32 %v731, %v919
    %921 = vmatmul.f32.gmra.mxu0 %v501
    %v922 = vpop.f32.mrf.mxu0
    %v923 = vadd.f32 %v736, %v922
    %924 = vmatmul.f32.gmra.mxu0 %v502
    %v925 = vpop.f32.mrf.mxu0
    %v926 = vadd.f32 %v741, %v925
    %927 = vmatmul.f32.gmra.mxu0 %v503
    %v928 = vpop.f32.mrf.mxu0
    %v929 = vadd.f32 %v746, %v928
    %930 = vmatmul.f32.gmra.mxu0 %v504
    %v931 = vpop.f32.mrf.mxu0
    %v932 = vadd.f32 %v751, %v931
    %933 = vmatmul.f32.gmra.mxu0 %v505
    %v934 = vpop.f32.mrf.mxu0
    %v935 = vadd.f32 %v756, %v934
    %936 = vmatmul.f32.gmra.mxu0 %v506
    %v937 = vpop.f32.mrf.mxu0
    %v938 = vadd.f32 %v761, %v937
    %939 = vmatmul.f32.gmra.mxu0 %v507
    %v940 = vpop.f32.mrf.mxu0
    %v941 = vadd.f32 %v766, %v940
    %942 = vmatmul.f32.gmra.mxu0 %v508
    %v943 = vpop.f32.mrf.mxu0
    %v944 = vadd.f32 %v771, %v943
    %945 = vmatmul.f32.gmra.mxu0 %v509
    %v946 = vpop.f32.mrf.mxu0
    %v947 = vadd.f32 %v776, %v946
    %948 = vmatmul.f32.gmra.mxu0 %v510
    %v949 = vpop.f32.mrf.mxu0
    %v950 = vadd.f32 %v781, %v949
    %951 = vmatmul.f32.gmra.mxu0 %v511
    %v952 = vpop.f32.mrf.mxu0
    %v953 = vadd.f32 %v786, %v952
    %954 = vmatmul.f32.gmra.mxu0 %v512
    %v955 = vpop.f32.mrf.mxu0
    %v956 = vadd.f32 %v791, %v955
    %957 = vmatmul.f32.gmra.mxu0 %v513
    %v958 = vpop.f32.mrf.mxu0
    %v959 = vadd.f32 %v796, %v958
    %960 = vmatmul.f32.gmra.mxu0 %v514
    %v961 = vpop.f32.mrf.mxu0
    %v962 = vadd.f32 %v801, %v961
    %963 = vdwg.mxu0
    %964 = vxpose.xlu0.b32.start [1/16] %v821, 128
    %965 = vxpose.xlu0.b32.cont [2/16] %v824, 128
    %966 = vxpose.xlu0.b32.cont [3/16] %v827, 128
    %967 = vxpose.xlu0.b32.cont [4/16] %v830, 128
    %968 = vxpose.xlu0.b32.cont [5/16] 0.0, 128
    %969 = vxpose.xlu0.b32.cont [6/16] 0.0, 128
    %970 = vxpose.xlu0.b32.cont [7/16] 0.0, 128
    %971 = vxpose.xlu0.b32.cont [8/16] 0.0, 128
    %972 = vxpose.xlu0.b32.cont [9/16] 0.0, 128
    %973 = vxpose.xlu0.b32.cont [10/16] 0.0, 128
    %974 = vxpose.xlu0.b32.cont [11/16] 0.0, 128
    %975 = vxpose.xlu0.b32.cont [12/16] 0.0, 128
    %976 = vxpose.xlu0.b32.cont [13/16] 0.0, 128
    %977 = vxpose.xlu0.b32.cont [14/16] 0.0, 128
    %978 = vxpose.xlu0.b32.cont [15/16] 0.0, 128
    %979 = vxpose.xlu0.b32.end [16/16] 0.0, 128
    %v980 = vpop.trf.xlu0
    %v981 = vpop.trf.xlu0
    %v982 = vpop.trf.xlu0
    %v983 = vpop.trf.xlu0
    %v984 = vpop.trf.xlu0
    %v985 = vpop.trf.xlu0
    %v986 = vpop.trf.xlu0
    %v987 = vpop.trf.xlu0
    %v988 = vpop.trf.xlu0
    %v989 = vpop.trf.xlu0
    %v990 = vpop.trf.xlu0
    %v991 = vpop.trf.xlu0
    %v992 = vpop.trf.xlu0
    %v993 = vpop.trf.xlu0
    %v994 = vpop.trf.xlu0
    %v995 = vpop.trf.xlu0
    %996 = vxpose.xlu0.b32.start [1/16] %v833, 128
    %997 = vxpose.xlu0.b32.cont [2/16] %v836, 128
    %998 = vxpose.xlu0.b32.cont [3/16] %v839, 128
    %999 = vxpose.xlu0.b32.cont [4/16] %v842, 128
    %1000 = vxpose.xlu0.b32.cont [5/16] 0.0, 128
    %1001 = vxpose.xlu0.b32.cont [6/16] 0.0, 128
    %1002 = vxpose.xlu0.b32.cont [7/16] 0.0, 128
    %1003 = vxpose.xlu0.b32.cont [8/16] 0.0, 128
    %1004 = vxpose.xlu0.b32.cont [9/16] 0.0, 128
    %1005 = vxpose.xlu0.b32.cont [10/16] 0.0, 128
    %1006 = vxpose.xlu0.b32.cont [11/16] 0.0, 128
    %1007 = vxpose.xlu0.b32.cont [12/16] 0.0, 128
    %1008 = vxpose.xlu0.b32.cont [13/16] 0.0, 128
    %1009 = vxpose.xlu0.b32.cont [14/16] 0.0, 128
    %1010 = vxpose.xlu0.b32.cont [15/16] 0.0, 128
    %1011 = vxpose.xlu0.b32.end [16/16] 0.0, 128
    %v1012 = vpop.trf.xlu0
    %v1013 = vpop.trf.xlu0
    %v1014 = vpop.trf.xlu0
    %v1015 = vpop.trf.xlu0
    %v1016 = vpop.trf.xlu0
    %v1017 = vpop.trf.xlu0
    %v1018 = vpop.trf.xlu0
    %v1019 = vpop.trf.xlu0
    %v1020 = vpop.trf.xlu0
    %v1021 = vpop.trf.xlu0
    %v1022 = vpop.trf.xlu0
    %v1023 = vpop.trf.xlu0
    %v1024 = vpop.trf.xlu0
    %v1025 = vpop.trf.xlu0
    %v1026 = vpop.trf.xlu0
    %v1027 = vpop.trf.xlu0
    %1028 = vxpose.xlu0.b32.start [1/16] %v845, 128
    %1029 = vxpose.xlu0.b32.cont [2/16] %v848, 128
    %1030 = vxpose.xlu0.b32.cont [3/16] %v851, 128
    %1031 = vxpose.xlu0.b32.cont [4/16] %v854, 128
    %1032 = vxpose.xlu0.b32.cont [5/16] 0.0, 128
    %1033 = vxpose.xlu0.b32.cont [6/16] 0.0, 128
    %1034 = vxpose.xlu0.b32.cont [7/16] 0.0, 128
    %1035 = vxpose.xlu0.b32.cont [8/16] 0.0, 128
    %1036 = vxpose.xlu0.b32.cont [9/16] 0.0, 128
    %1037 = vxpose.xlu0.b32.cont [10/16] 0.0, 128
    %1038 = vxpose.xlu0.b32.cont [11/16] 0.0, 128
    %1039 = vxpose.xlu0.b32.cont [12/16] 0.0, 128
    %1040 = vxpose.xlu0.b32.cont [13/16] 0.0, 128
    %1041 = vxpose.xlu0.b32.cont [14/16] 0.0, 128
    %1042 = vxpose.xlu0.b32.cont [15/16] 0.0, 128
    %1043 = vxpose.xlu0.b32.end [16/16] 0.0, 128
    %v1044 = vpop.trf.xlu0
    %v1045 = vpop.trf.xlu0
    %v1046 = vpop.trf.xlu0
    %v1047 = vpop.trf.xlu0
    %v1048 = vpop.trf.xlu0
    %v1049 = vpop.trf.xlu0
    %v1050 = vpop.trf.xlu0
    %v1051 = vpop.trf.xlu0
    %v1052 = vpop.trf.xlu0
    %v1053 = vpop.trf.xlu0
    %v1054 = vpop.trf.xlu0
    %v1055 = vpop.trf.xlu0
    %v1056 = vpop.trf.xlu0
    %v1057 = vpop.trf.xlu0
    %v1058 = vpop.trf.xlu0
    %v1059 = vpop.trf.xlu0
    %1060 = vxpose.xlu0.b32.start [1/16] %v857, 128
    %1061 = vxpose.xlu0.b32.cont [2/16] %v860, 128
    %1062 = vxpose.xlu0.b32.cont [3/16] %v863, 128
    %1063 = vxpose.xlu0.b32.cont [4/16] %v866, 128
    %1064 = vxpose.xlu0.b32.cont [5/16] 0.0, 128
    %1065 = vxpose.xlu0.b32.cont [6/16] 0.0, 128
    %1066 = vxpose.xlu0.b32.cont [7/16] 0.0, 128
    %1067 = vxpose.xlu0.b32.cont [8/16] 0.0, 128
    %1068 = vxpose.xlu0.b32.cont [9/16] 0.0, 128
    %1069 = vxpose.xlu0.b32.cont [10/16] 0.0, 128
    %1070 = vxpose.xlu0.b32.cont [11/16] 0.0, 128
    %1071 = vxpose.xlu0.b32.cont [12/16] 0.0, 128
    %1072 = vxpose.xlu0.b32.cont [13/16] 0.0, 128
    %1073 = vxpose.xlu0.b32.cont [14/16] 0.0, 128
    %1074 = vxpose.xlu0.b32.cont [15/16] 0.0, 128
    %1075 = vxpose.xlu0.b32.end [16/16] 0.0, 128
    %v1076 = vpop.trf.xlu0
    %v1077 = vpop.trf.xlu0
    %v1078 = vpop.trf.xlu0
    %v1079 = vpop.trf.xlu0
    %v1080 = vpop.trf.xlu0
    %v1081 = vpop.trf.xlu0
    %v1082 = vpop.trf.xlu0
    %v1083 = vpop.trf.xlu0
    %v1084 = vpop.trf.xlu0
    %v1085 = vpop.trf.xlu0
    %v1086 = vpop.trf.xlu0
    %v1087 = vpop.trf.xlu0
    %v1088 = vpop.trf.xlu0
    %v1089 = vpop.trf.xlu0
    %v1090 = vpop.trf.xlu0
    %v1091 = vpop.trf.xlu0
    %vm1092 = vcmask 261120
    %v1094 = vsel %vm1092, %v980, 0
    %1096 = vmatpush.msra.mxu0 0.0
    %1097 = vmatpush.msra.mxu0 0.0
    %1098 = vmatpush.msra.mxu0 0.0
    %1099 = vmatpush.msra.mxu0 0.0
    %1100 = vmatpush.msra.mxu0 0.0
    %1101 = vmatpush.msra.mxu0 0.0
    %1102 = vmatpush.msra.mxu0 0.0
    %1103 = vmatpush.msra.mxu0 0.0
    %1104 = vmatpush.msra.mxu0 0.0
    %1105 = vmatpush.msra.mxu0 0.0
    %1106 = vmatpush.msra.mxu0 0.0
    %1107 = vmatpush.msra.mxu0 0.0
    %1108 = vmatpush.msra.mxu0 %v878
    %1109 = vmatpush.msra.mxu0 %v875
    %1110 = vmatpush.msra.mxu0 %v872
    %1111 = vmatpush.msra.mxu0 %v869
    %1112 = vmatmul.f32.gmra.mxu0 %v1094
    %v1113 = vpop.f32.mrf.mxu0
    %v1114 = vadd.f32 0.0, %v1113
    %1115 = vdwg.mxu0
    %v1117 = vsel %vm1092, %v1012, 0
    %1119 = vmatpush.msra.mxu0 0.0
    %1120 = vmatpush.msra.mxu0 0.0
    %1121 = vmatpush.msra.mxu0 0.0
    %1122 = vmatpush.msra.mxu0 0.0
    %1123 = vmatpush.msra.mxu0 0.0
    %1124 = vmatpush.msra.mxu0 0.0
    %1125 = vmatpush.msra.mxu0 0.0
    %1126 = vmatpush.msra.mxu0 0.0
    %1127 = vmatpush.msra.mxu0 0.0
    %1128 = vmatpush.msra.mxu0 0.0
    %1129 = vmatpush.msra.mxu0 0.0
    %1130 = vmatpush.msra.mxu0 0.0
    %1131 = vmatpush.msra.mxu0 %v890
    %1132 = vmatpush.msra.mxu0 %v887
    %1133 = vmatpush.msra.mxu0 %v884
    %1134 = vmatpush.msra.mxu0 %v881
    %1135 = vmatmul.f32.gmra.mxu0 %v1117
    %v1136 = vpop.f32.mrf.mxu0
    %v1137 = vadd.f32 0.0, %v1136
    %1138 = vdwg.mxu0
    %v1140 = vsel %vm1092, %v1044, 0
    %1142 = vmatpush.msra.mxu0 0.0
    %1143 = vmatpush.msra.mxu0 0.0
    %1144 = vmatpush.msra.mxu0 0.0
    %1145 = vmatpush.msra.mxu0 0.0
    %1146 = vmatpush.msra.mxu0 0.0
    %1147 = vmatpush.msra.mxu0 0.0
    %1148 = vmatpush.msra.mxu0 0.0
    %1149 = vmatpush.msra.mxu0 0.0
    %1150 = vmatpush.msra.mxu0 0.0
    %1151 = vmatpush.msra.mxu0 0.0
    %1152 = vmatpush.msra.mxu0 0.0
    %1153 = vmatpush.msra.mxu0 0.0
    %1154 = vmatpush.msra.mxu0 %v902
    %1155 = vmatpush.msra.mxu0 %v899
    %1156 = vmatpush.msra.mxu0 %v896
    %1157 = vmatpush.msra.mxu0 %v893
    %1158 = vmatmul.f32.gmra.mxu0 %v1140
    %v1159 = vpop.f32.mrf.mxu0
    %v1160 = vadd.f32 0.0, %v1159
    %1161 = vdwg.mxu0
    %v1163 = vsel %vm1092, %v1076, 0
    %1165 = vmatpush.msra.mxu0 0.0
    %1166 = vmatpush.msra.mxu0 0.0
    %1167 = vmatpush.msra.mxu0 0.0
    %1168 = vmatpush.msra.mxu0 0.0
    %1169 = vmatpush.msra.mxu0 0.0
    %1170 = vmatpush.msra.mxu0 0.0
    %1171 = vmatpush.msra.mxu0 0.0
    %1172 = vmatpush.msra.mxu0 0.0
    %1173 = vmatpush.msra.mxu0 0.0
    %1174 = vmatpush.msra.mxu0 0.0
    %1175 = vmatpush.msra.mxu0 0.0
    %1176 = vmatpush.msra.mxu0 0.0
    %1177 = vmatpush.msra.mxu0 %v914
    %1178 = vmatpush.msra.mxu0 %v911
    %1179 = vmatpush.msra.mxu0 %v908
    %1180 = vmatpush.msra.mxu0 %v905
    %1181 = vmatmul.f32.gmra.mxu0 %v1163
    %v1182 = vpop.f32.mrf.mxu0
    %v1183 = vadd.f32 0.0, %v1182
    %1184 = vdwg.mxu0
    %vm1185 = vcmask 64512
    %v1186 = vsel %vm1185, %v1114, -inf
    %1187 = vmax.xlane.f32.xlu0 %v1186
    %v1188 = vpop.xlane.xlu0 %1187
    %v1189 = vsel %vm1185, %v1137, -inf
    %1190 = vmax.xlane.f32.xlu0 %v1189
    %v1191 = vpop.xlane.xlu0 %1190
    %v1192 = vsel %vm1185, %v1160, -inf
    %1193 = vmax.xlane.f32.xlu0 %v1192
    %v1194 = vpop.xlane.xlu0 %1193
    %v1195 = vsel %vm1185, %v1183, -inf
    %1196 = vmax.xlane.f32.xlu0 %v1195
    %v1197 = vpop.xlane.xlu0 %1196
    %v1198 = vsub.f32 %v1114, %v1188
    %v1199 = vsub.f32 %v1137, %v1191
    %v1200 = vsub.f32 %v1160, %v1194
    %v1201 = vsub.f32 %v1183, %v1197
    %v1202 = vmul.f32 %v1198, 1.442695
    %v1203 = vpow.pop %v1202
    %v1204 = vmul.f32 %v1199, 1.442695
    %v1205 = vpow.pop %v1204
    %v1206 = vmul.f32 %v1200, 1.442695
    %v1207 = vpow.pop %v1206
    %v1208 = vmul.f32 %v1201, 1.442695
    %v1209 = vpow.pop %v1208
    %v1210 = vsel %vm1185, %v1203, 0.0
    %1211 = vadd.xlane.f32.xlu0 %v1210
    %v1212 = vpop.xlane.xlu0 %1211
    %v1213 = vsel %vm1185, %v1205, 0.0
    %1214 = vadd.xlane.f32.xlu0 %v1213
    %v1215 = vpop.xlane.xlu0 %1214
    %v1216 = vsel %vm1185, %v1207, 0.0
    %1217 = vadd.xlane.f32.xlu0 %v1216
    %v1218 = vpop.xlane.xlu0 %1217
    %v1219 = vsel %vm1185, %v1209, 0.0
    %1220 = vadd.xlane.f32.xlu0 %v1219
    %v1221 = vpop.xlane.xlu0 %1220
    %v1222 = vrcp.pop %v1212
    %v1223 = vrcp.pop %v1215
    %v1224 = vrcp.pop %v1218
    %v1225 = vrcp.pop %v1221
    %v1226 = vmul.f32 %v1203, %v1222
    %v1227 = vmul.f32 %v1205, %v1223
    %v1228 = vmul.f32 %v1207, %v1224
    %v1229 = vmul.f32 %v1209, %v1225
    %v1231 = vsel %vm1185, %v917, 0
    %v1234 = vsel %vm1185, %v920, 0
    %v1237 = vsel %vm1185, %v923, 0
    %v1240 = vsel %vm1185, %v926, 0
    %v1243 = vsel %vm1185, %v1226, 0
    %1245 = vmatpush.xpose.msra.mxu0 0.0
    %1246 = vmatpush.xpose.msra.mxu0 0.0
    %1247 = vmatpush.xpose.msra.mxu0 0.0
    %1248 = vmatpush.xpose.msra.mxu0 0.0
    %1249 = vmatpush.xpose.msra.mxu0 0.0
    %1250 = vmatpush.xpose.msra.mxu0 0.0
    %1251 = vmatpush.xpose.msra.mxu0 0.0
    %1252 = vmatpush.xpose.msra.mxu0 0.0
    %1253 = vmatpush.xpose.msra.mxu0 0.0
    %1254 = vmatpush.xpose.msra.mxu0 0.0
    %1255 = vmatpush.xpose.msra.mxu0 0.0
    %1256 = vmatpush.xpose.msra.mxu0 0.0
    %1257 = vmatpush.xpose.msra.mxu0 0.0
    %1258 = vmatpush.xpose.msra.mxu0 0.0
    %1259 = vmatpush.xpose.msra.mxu0 0.0
    %1260 = vmatpush.xpose.msra.mxu0 %v1243
    %1261 = vmatmul.f32.gmra.mxu0 %v1231
    %v1262 = vpop.f32.mrf.mxu0
    %v1263 = vadd.f32 0.0, %v1262
    %1264 = vmatmul.f32.gmra.mxu0 %v1234
    %v1265 = vpop.f32.mrf.mxu0
    %v1266 = vadd.f32 0.0, %v1265
    %1267 = vmatmul.f32.gmra.mxu0 %v1237
    %v1268 = vpop.f32.mrf.mxu0
    %v1269 = vadd.f32 0.0, %v1268
    %1270 = vmatmul.f32.gmra.mxu0 %v1240
    %v1271 = vpop.f32.mrf.mxu0
    %v1272 = vadd.f32 0.0, %v1271
    %1273 = vdwg.mxu0
    %v1275 = vsel %vm1185, %v929, 0
    %v1278 = vsel %vm1185, %v932, 0
    %v1281 = vsel %vm1185, %v935, 0
    %v1284 = vsel %vm1185, %v938, 0
    %v1287 = vsel %vm1185, %v1227, 0
    %1289 = vmatpush.xpose.msra.mxu0 0.0
    %1290 = vmatpush.xpose.msra.mxu0 0.0
    %1291 = vmatpush.xpose.msra.mxu0 0.0
    %1292 = vmatpush.xpose.msra.mxu0 0.0
    %1293 = vmatpush.xpose.msra.mxu0 0.0
    %1294 = vmatpush.xpose.msra.mxu0 0.0
    %1295 = vmatpush.xpose.msra.mxu0 0.0
    %1296 = vmatpush.xpose.msra.mxu0 0.0
    %1297 = vmatpush.xpose.msra.mxu0 0.0
    %1298 = vmatpush.xpose.msra.mxu0 0.0
    %1299 = vmatpush.xpose.msra.mxu0 0.0
    %1300 = vmatpush.xpose.msra.mxu0 0.0
    %1301 = vmatpush.xpose.msra.mxu0 0.0
    %1302 = vmatpush.xpose.msra.mxu0 0.0
    %1303 = vmatpush.xpose.msra.mxu0 0.0
    %1304 = vmatpush.xpose.msra.mxu0 %v1287
    %1305 = vmatmul.f32.gmra.mxu0 %v1275
    %v1306 = vpop.f32.mrf.mxu0
    %v1307 = vadd.f32 0.0, %v1306
    %1308 = vmatmul.f32.gmra.mxu0 %v1278
    %v1309 = vpop.f32.mrf.mxu0
    %v1310 = vadd.f32 0.0, %v1309
    %1311 = vmatmul.f32.gmra.mxu0 %v1281
    %v1312 = vpop.f32.mrf.mxu0
    %v1313 = vadd.f32 0.0, %v1312
    %1314 = vmatmul.f32.gmra.mxu0 %v1284
    %v1315 = vpop.f32.mrf.mxu0
    %v1316 = vadd.f32 0.0, %v1315
    %1317 = vdwg.mxu0
    %v1319 = vsel %vm1185, %v941, 0
    %v1322 = vsel %vm1185, %v944, 0
    %v1325 = vsel %vm1185, %v947, 0
    %v1328 = vsel %vm1185, %v950, 0
    %v1331 = vsel %vm1185, %v1228, 0
    %1333 = vmatpush.xpose.msra.mxu0 0.0
    %1334 = vmatpush.xpose.msra.mxu0 0.0
    %1335 = vmatpush.xpose.msra.mxu0 0.0
    %1336 = vmatpush.xpose.msra.mxu0 0.0
    %1337 = vmatpush.xpose.msra.mxu0 0.0
    %1338 = vmatpush.xpose.msra.mxu0 0.0
    %1339 = vmatpush.xpose.msra.mxu0 0.0
    %1340 = vmatpush.xpose.msra.mxu0 0.0
    %1341 = vmatpush.xpose.msra.mxu0 0.0
    %1342 = vmatpush.xpose.msra.mxu0 0.0
    %1343 = vmatpush.xpose.msra.mxu0 0.0
    %1344 = vmatpush.xpose.msra.mxu0 0.0
    %1345 = vmatpush.xpose.msra.mxu0 0.0
    %1346 = vmatpush.xpose.msra.mxu0 0.0
    %1347 = vmatpush.xpose.msra.mxu0 0.0
    %1348 = vmatpush.xpose.msra.mxu0 %v1331
    %1349 = vmatmul.f32.gmra.mxu0 %v1319
    %v1350 = vpop.f32.mrf.mxu0
    %v1351 = vadd.f32 0.0, %v1350
    %1352 = vmatmul.f32.gmra.mxu0 %v1322
    %v1353 = vpop.f32.mrf.mxu0
    %v1354 = vadd.f32 0.0, %v1353
    %1355 = vmatmul.f32.gmra.mxu0 %v1325
    %v1356 = vpop.f32.mrf.mxu0
    %v1357 = vadd.f32 0.0, %v1356
    %1358 = vmatmul.f32.gmra.mxu0 %v1328
    %v1359 = vpop.f32.mrf.mxu0
    %v1360 = vadd.f32 0.0, %v1359
    %1361 = vdwg.mxu0
    %v1363 = vsel %vm1185, %v953, 0
    %v1366 = vsel %vm1185, %v956, 0
    %v1369 = vsel %vm1185, %v959, 0
    %v1372 = vsel %vm1185, %v962, 0
    %v1375 = vsel %vm1185, %v1229, 0
    %1377 = vmatpush.xpose.msra.mxu0 0.0
    %1378 = vmatpush.xpose.msra.mxu0 0.0
    %1379 = vmatpush.xpose.msra.mxu0 0.0
    %1380 = vmatpush.xpose.msra.mxu0 0.0
    %1381 = vmatpush.xpose.msra.mxu0 0.0
    %1382 = vmatpush.xpose.msra.mxu0 0.0
    %1383 = vmatpush.xpose.msra.mxu0 0.0
    %1384 = vmatpush.xpose.msra.mxu0 0.0
    %1385 = vmatpush.xpose.msra.mxu0 0.0
    %1386 = vmatpush.xpose.msra.mxu0 0.0
    %1387 = vmatpush.xpose.msra.mxu0 0.0
    %1388 = vmatpush.xpose.msra.mxu0 0.0
    %1389 = vmatpush.xpose.msra.mxu0 0.0
    %1390 = vmatpush.xpose.msra.mxu0 0.0
    %1391 = vmatpush.xpose.msra.mxu0 0.0
    %1392 = vmatpush.xpose.msra.mxu0 %v1375
    %1393 = vmatmul.f32.gmra.mxu0 %v1363
    %v1394 = vpop.f32.mrf.mxu0
    %v1395 = vadd.f32 0.0, %v1394
    %1396 = vmatmul.f32.gmra.mxu0 %v1366
    %v1397 = vpop.f32.mrf.mxu0
    %v1398 = vadd.f32 0.0, %v1397
    %1399 = vmatmul.f32.gmra.mxu0 %v1369
    %v1400 = vpop.f32.mrf.mxu0
    %v1401 = vadd.f32 0.0, %v1400
    %1402 = vmatmul.f32.gmra.mxu0 %v1372
    %v1403 = vpop.f32.mrf.mxu0
    %v1404 = vadd.f32 0.0, %v1403
    %1405 = vdwg.mxu0
    %1406 = vxpose.xlu0.b32.start [1/16] %v1263, 128
    %1407 = vxpose.xlu0.b32.cont [2/16] %v1266, 128
    %1408 = vxpose.xlu0.b32.cont [3/16] %v1269, 128
    %1409 = vxpose.xlu0.b32.cont [4/16] %v1272, 128
    %1410 = vxpose.xlu0.b32.cont [5/16] %v1307, 128
    %1411 = vxpose.xlu0.b32.cont [6/16] %v1310, 128
    %1412 = vxpose.xlu0.b32.cont [7/16] %v1313, 128
    %1413 = vxpose.xlu0.b32.cont [8/16] %v1316, 128
    %1414 = vxpose.xlu0.b32.cont [9/16] %v1351, 128
    %1415 = vxpose.xlu0.b32.cont [10/16] %v1354, 128
    %1416 = vxpose.xlu0.b32.cont [11/16] %v1357, 128
    %1417 = vxpose.xlu0.b32.cont [12/16] %v1360, 128
    %1418 = vxpose.xlu0.b32.cont [13/16] %v1395, 128
    %1419 = vxpose.xlu0.b32.cont [14/16] %v1398, 128
    %1420 = vxpose.xlu0.b32.cont [15/16] %v1401, 128
    %1421 = vxpose.xlu0.b32.end [16/16] %v1404, 128
    %v1422 = vpop.trf.xlu0
    %v1423 = vpop.trf.xlu0
    %v1424 = vpop.trf.xlu0
    %v1425 = vpop.trf.xlu0
    %v1426 = vpop.trf.xlu0
    %v1427 = vpop.trf.xlu0
    %v1428 = vpop.trf.xlu0
    %v1429 = vpop.trf.xlu0
    %v1430 = vpop.trf.xlu0
    %v1431 = vpop.trf.xlu0
    %v1432 = vpop.trf.xlu0
    %v1433 = vpop.trf.xlu0
    %v1434 = vpop.trf.xlu0
    %v1435 = vpop.trf.xlu0
    %v1436 = vpop.trf.xlu0
    %v1437 = vpop.trf.xlu0
    %v1438 = vld [vmem:[%s5] sm:$0xf]
    %v1439 = vld [vmem:[%s5 + $0x4] sm:$0xf]
    %v1440 = vld [vmem:[%s5 + $0x8] sm:$0xf]
    %v1441 = vld [vmem:[%s5 + $0xc] sm:$0xf]
    %v1442 = vld [vmem:[%s5 + $0x10] sm:$0xf]
    %v1443 = vld [vmem:[%s5 + $0x14] sm:$0xf]
    %v1444 = vld [vmem:[%s5 + $0x18] sm:$0xf]
    %v1445 = vld [vmem:[%s5 + $0x1c] sm:$0xf]
    %v1446 = vld [vmem:[%s5 + $0x20] sm:$0xf]
    %v1447 = vld [vmem:[%s5 + $0x24] sm:$0xf]
    %v1448 = vld [vmem:[%s5 + $0x28] sm:$0xf]
    %v1449 = vld [vmem:[%s5 + $0x2c] sm:$0xf]
    %v1450 = vld [vmem:[%s5 + $0x30] sm:$0xf]
    %v1451 = vld [vmem:[%s5 + $0x34] sm:$0xf]
    %v1452 = vld [vmem:[%s5 + $0x38] sm:$0xf]
    %v1453 = vld [vmem:[%s5 + $0x3c] sm:$0xf]
    %v1454 = vunpack.c.l.bf16 %v1438
    %v1455 = vunpack.c.l.bf16 %v1439
    %v1456 = vunpack.c.l.bf16 %v1440
    %v1457 = vunpack.c.l.bf16 %v1441
    %v1458 = vunpack.c.l.bf16 %v1442
    %v1459 = vunpack.c.l.bf16 %v1443
    %v1460 = vunpack.c.l.bf16 %v1444
    %v1461 = vunpack.c.l.bf16 %v1445
    %v1462 = vunpack.c.l.bf16 %v1446
    %v1463 = vunpack.c.l.bf16 %v1447
    %v1464 = vunpack.c.l.bf16 %v1448
    %v1465 = vunpack.c.l.bf16 %v1449
    %v1466 = vunpack.c.l.bf16 %v1450
    %v1467 = vunpack.c.l.bf16 %v1451
    %v1468 = vunpack.c.l.bf16 %v1452
    %v1469 = vunpack.c.l.bf16 %v1453
    %v1470 = vld [vmem:[%s6] sm:$0x1]
    %v1472 = vperm.slane %v1470, 0
    %1474 = vmatpush.msra.mxu0 %v1469
    %1475 = vmatpush.msra.mxu0 %v1468
    %1476 = vmatpush.msra.mxu0 %v1467
    %1477 = vmatpush.msra.mxu0 %v1466
    %1478 = vmatpush.msra.mxu0 %v1465
    %1479 = vmatpush.msra.mxu0 %v1464
    %1480 = vmatpush.msra.mxu0 %v1463
    %1481 = vmatpush.msra.mxu0 %v1462
    %1482 = vmatpush.msra.mxu0 %v1461
    %1483 = vmatpush.msra.mxu0 %v1460
    %1484 = vmatpush.msra.mxu0 %v1459
    %1485 = vmatpush.msra.mxu0 %v1458
    %1486 = vmatpush.msra.mxu0 %v1457
    %1487 = vmatpush.msra.mxu0 %v1456
    %1488 = vmatpush.msra.mxu0 %v1455
    %1489 = vmatpush.msra.mxu0 %v1454
    %1490 = vmatmul.f32.gmra.mxu0 %v1422
    %v1491 = vpop.f32.mrf.mxu0
    %v1492 = vadd.f32 %v1472, %v1491
    %1493 = vdwg.mxu0
    %1494 = vmax.xlane.f32.xlu0 %v1492
    %v1495 = vpop.xlane.xlu0 %1494
    %v1496 = vsub.f32 %v1492, %v1495
    %v1497 = vmul.f32 %v1496, 1.442695
    %v1498 = vpow.pop %v1497
    %1499 = vadd.xlane.f32.xlu0 %v1498
    %v1500 = vpop.xlane.xlu0 %1499
    %v1501 = vrcp.pop %v1500
    %v1502 = vmul.f32 %v1498, %v1501
    %1503 = vst [vmem:[#allocation5] sm:$0xff] %v1502
    // Predicated region
    $region34: #{tpu_custom_call.1} parent=1 // pred_check
      _
    $region35: #{tpu_custom_call.1} parent=1 // pred_check_branch
      %1505 = sbr.rel (0) target = $region37
    $region36: #{tpu_custom_call.1} parent=1 // pred_region
      %1507 = vsyncadd [#allocation4], 0
      %s1509 = sshll.u32 [#allocation5], 4
      %s1510 = int_to_ptr.vmem [resolvable:$true] %s1509
      %s1511 = sshll.u32 %s7, 4
      %s1512 = int_to_ptr.hbm [resolvable:$true] %s1511
      %1514 = dma.vmem_to_hbm [thread:$0]  %s1510, 128, %s1512, [#allocation4]
    $region37: #{tpu_custom_call.1} parent=1 // pred_fallthru
      _
    // Predicated region
    $region38: #{tpu_custom_call.1} parent=1 // pred_check
      _
    $region39: #{tpu_custom_call.1} parent=1 // pred_check_branch
      %1516 = sbr.rel (0) target = $region41
    $region40: #{tpu_custom_call.1} parent=1 // pred_region
      %1518 = dma.done [#allocation4], 128
    $region41: #{tpu_custom_call.1} parent=1 // pred_fallthru
      _
    %1519 = vsyncpa [#allocation3], 1
    %1520 = vsyncpa [#allocation4], 1

</llo_original>
